<compile_context>
chip_gen: v5e
topology: v5e:2x2
jax: 0.10.0
libtpu: 0.0.40
codegen_flags: <defaults>
</compile_context>

<pallas_src>
import math

import jax
import jax.numpy as jnp
from jax.experimental import pallas as pl
from jax.experimental.pallas import tpu as pltpu

NUM_HEADS = 8


def mha_kernel(q_ref, k_ref, v_ref, wqT_ref, wkT_ref, wvT_ref, woT_ref,
               bo_ref, o_ref):
    """Whole forward pass, all operands resident in VMEM (small shapes)."""
    B, Lq, Dq = q_ref.shape
    _, Lk, Dk = k_ref.shape
    _, _, Dv = v_ref.shape
    D = wqT_ref.shape[1]
    H = NUM_HEADS
    dh = D // H
    scale = 1.0 / math.sqrt(D)   # PyTorch scales by sqrt(dim_output), not head dim.

    # ---- Projections: one full-D 2-D matmul each (batch*seq folded into M) ---
    q2 = q_ref[...].reshape(B * Lq, Dq)                        # [Nq, Dq]
    k2 = k_ref[...].reshape(B * Lk, Dk)                        # [Nk, Dk]
    v2 = v_ref[...].reshape(B * Lk, Dv)                        # [Nk, Dv]
    qp = jnp.dot(q2, wqT_ref[...], preferred_element_type=jnp.float32)  # [Nq, D]
    kp = jnp.dot(k2, wkT_ref[...], preferred_element_type=jnp.float32)  # [Nk, D]
    vp = jnp.dot(v2, wvT_ref[...], preferred_element_type=jnp.float32)  # [Nk, D]

    # ---- Head-major stacks [H*B, L, dh] --------------------------------------
    # Matches torch.cat(x.chunk(H, -1), 0): index along dim 0 is h*B + b.
    # Heads are static lane windows of the already-computed projections — no
    # recompute, no broadcasts.
    qp3 = qp.reshape(B, Lq, D)
    kp3 = kp.reshape(B, Lk, D)
    vp3 = vp.reshape(B, Lk, D)
    qh = jnp.concatenate([qp3[:, :, h * dh:(h + 1) * dh] for h in range(H)],
                         axis=0) * scale                       # [H*B, Lq, dh]
    kh = jnp.concatenate([kp3[:, :, h * dh:(h + 1) * dh] for h in range(H)],
                         axis=0)                               # [H*B, Lk, dh]
    vh = jnp.concatenate([vp3[:, :, h * dh:(h + 1) * dh] for h in range(H)],
                         axis=0)                               # [H*B, Lk, dh]

    # ---- Attention: two batched einsums + one fused softmax over all heads ---
    logits = jnp.einsum('nqd,nkd->nqk', qh, kh,
                        preferred_element_type=jnp.float32)    # [H*B, Lq, Lk]
    m = jnp.max(logits, axis=-1, keepdims=True)
    e = jnp.exp(logits - m)
    denom = jnp.sum(e, axis=-1, keepdims=True)
    a = e * pl.reciprocal(denom, approx=True)                  # EUP, not a VALU divide
    attn = jnp.einsum('nqk,nkd->nqd', a, vh,
                      preferred_element_type=jnp.float32)      # [H*B, Lq, dh]

    # Inverse head rearrangement: cheap leading-dim slices + the single lane
    # concat the PyTorch module itself performs.
    attn = jnp.concatenate([attn[h * B:(h + 1) * B] for h in range(H)],
                           axis=-1)                            # [B, Lq, D]
    attn2 = attn.reshape(B * Lq, D)                            # [Nq, D]

    # ---- Residual + output projection ----------------------------------------
    outs = qp + attn2
    proj = jnp.dot(outs, woT_ref[...],
                   preferred_element_type=jnp.float32) + bo_ref[...]
    o_ref[...] = (outs + jnp.maximum(proj, 0.0)).astype(o_ref.dtype)


def multi_head_attention(query, key, value, wq, wk, wv, wo, bo):
    B, Lq, Dq = query.shape
    _, Lk, Dk = key.shape
    Dv = value.shape[-1]
    D = wq.shape[0]
    H = NUM_HEADS

    # Layout plumbing done once in plain JAX outside the kernel (negligible):
    # pre-transposed [in, out] weights so the kernel never relayouts weights.
    wqT = wq.T                                                 # [Dq, D]
    wkT = wk.T                                                 # [Dk, D]
    wvT = wv.T                                                 # [Dv, D]
    woT = wo.T                                                 # [D, D]
    bo2 = bo.reshape(1, D)

    # Advisory cost hint for XLA's scheduler around the custom call.
    Nq, Nk = B * Lq, B * Lk
    flops = 2 * (Nq * Dq * D + Nk * Dk * D + Nk * Dv * D
                 + 2 * B * Lq * Lk * D + Nq * D * D)
    transcendentals = H * B * Lq * Lk + H * B * Lq
    bytes_accessed = 4 * (query.size + key.size + value.size + wqT.size
                          + wkT.size + wvT.size + woT.size + bo2.size + Nq * D)

    vmem = pl.BlockSpec(memory_space=pltpu.MemorySpace.VMEM)
    out2 = pl.pallas_call(
        mha_kernel,
        out_shape=jax.ShapeDtypeStruct((Nq, D), jnp.float32),
        in_specs=[vmem] * 8,
        out_specs=vmem,
        cost_estimate=pl.CostEstimate(flops=int(flops),
                                      transcendentals=int(transcendentals),
                                      bytes_accessed=int(bytes_accessed)),
    )(query, key, value, wqT, wkT, wvT, woT, bo2)
    return out2.reshape(B, Lq, D)


def reference(query, key, value, wq, wk, wv, wo, bo, num_heads=NUM_HEADS):
    """Pure-JAX transliteration of the PyTorch forward (for verification)."""
    qp = query @ wq.T
    kp = key @ wk.T
    vp = value @ wv.T
    D = qp.shape[-1]
    q_ = jnp.concatenate(jnp.split(qp, num_heads, axis=-1), axis=0)
    k_ = jnp.concatenate(jnp.split(kp, num_heads, axis=-1), axis=0)
    v_ = jnp.concatenate(jnp.split(vp, num_heads, axis=-1), axis=0)
    logits = (q_ @ jnp.swapaxes(k_, -2, -1)) / math.sqrt(D)
    A = jax.nn.softmax(logits, axis=-1)
    outs = jnp.concatenate(jnp.split(A @ v_, num_heads, axis=0), axis=-1)
    outs = qp + outs
    outs = outs + jax.nn.relu(outs @ wo.T + bo.reshape(-1))
    return outs


if __name__ == "__main__":
    B, Lq, Lk = 2, 8, 16
    dim_query, dim_key, dim_value, dim_output = 16, 24, 20, 32

    root = jax.random.PRNGKey(0)
    kq, kk, kv, kwq, kwk, kwv, kwo, kbo = jax.random.split(root, 8)

    query = jax.random.normal(kq, (B, Lq, dim_query), jnp.float32)
    key = jax.random.normal(kk, (B, Lk, dim_key), jnp.float32)
    value = jax.random.normal(kv, (B, Lk, dim_value), jnp.float32)

    # Deterministic synthetic parameters (PyTorch Linear weight layout [out, in]).
    wq = 0.1 * jax.random.normal(kwq, (dim_output, dim_query), jnp.float32)
    wk = 0.1 * jax.random.normal(kwk, (dim_output, dim_key), jnp.float32)
    wv = 0.1 * jax.random.normal(kwv, (dim_output, dim_value), jnp.float32)
    wo = 0.1 * jax.random.normal(kwo, (dim_output, dim_output), jnp.float32)
    bo = 0.1 * jax.random.normal(kbo, (1, dim_output), jnp.float32)

    out = multi_head_attention(query, key, value, wq, wk, wv, wo, bo)
    out = jax.block_until_ready(out)

    ref = reference(query, key, value, wq, wk, wv, wo, bo)
    assert out.shape == (B, Lq, dim_output), out.shape
    # Tolerance covers the approx EUP reciprocal in the softmax (~1e-4 rel).
    assert jnp.allclose(out, ref, atol=2e-3, rtol=2e-3), \
        float(jnp.max(jnp.abs(out - ref)))

    print("KERNEL_OK")
</pallas_src>

<mosaic_0001>
module attributes {stable_mosaic.version = 11 : i64} {
  func.func @mha_kernel(%arg0: memref<2x8x16xf32, #tpu.memory_space<vmem>>, %arg1: memref<2x16x24xf32, #tpu.memory_space<vmem>>, %arg2: memref<2x16x20xf32, #tpu.memory_space<vmem>>, %arg3: memref<16x32xf32, #tpu.memory_space<vmem>>, %arg4: memref<24x32xf32, #tpu.memory_space<vmem>>, %arg5: memref<20x32xf32, #tpu.memory_space<vmem>>, %arg6: memref<32x32xf32, #tpu.memory_space<vmem>>, %arg7: memref<1x32xf32, #tpu.memory_space<vmem>>, %arg8: memref<16x32xf32, #tpu.memory_space<vmem>>) attributes {dimension_semantics = [], scalar_prefetch = 0 : i64, scratch_operands = 0 : i64, tpu.core_type = #tpu.core_type<tc>} {
    %c0 = arith.constant 0 : index
    %c0_0 = arith.constant 0 : index
    %c0_1 = arith.constant 0 : index
    %0 = vector.load %arg0[%c0, %c0_0, %c0_1] : memref<2x8x16xf32, #tpu.memory_space<vmem>>, vector<2x8x16xf32>
    %1 = vector.shape_cast %0 : vector<2x8x16xf32> to vector<16x16xf32>
    %c0_2 = arith.constant 0 : index
    %c0_3 = arith.constant 0 : index
    %c0_4 = arith.constant 0 : index
    %2 = vector.load %arg1[%c0_2, %c0_3, %c0_4] : memref<2x16x24xf32, #tpu.memory_space<vmem>>, vector<2x16x24xf32>
    %3 = vector.shape_cast %2 : vector<2x16x24xf32> to vector<32x24xf32>
    %c0_5 = arith.constant 0 : index
    %c0_6 = arith.constant 0 : index
    %c0_7 = arith.constant 0 : index
    %4 = vector.load %arg2[%c0_5, %c0_6, %c0_7] : memref<2x16x20xf32, #tpu.memory_space<vmem>>, vector<2x16x20xf32>
    %5 = vector.shape_cast %4 : vector<2x16x20xf32> to vector<32x20xf32>
    %c0_8 = arith.constant 0 : index
    %c0_9 = arith.constant 0 : index
    %6 = vector.load %arg3[%c0_8, %c0_9] : memref<16x32xf32, #tpu.memory_space<vmem>>, vector<16x32xf32>
    %cst = arith.constant dense<0.000000e+00> : vector<16x32xf32>
    %7 = tpu.matmul %1, %6, %cst {dimension_numbers = #tpu.dot_dimension_numbers<[1], [0], [0], [1], [0, 0, 1, 1], [], []>} : vector<16x16xf32>, vector<16x32xf32>, vector<16x32xf32> -> vector<16x32xf32>
    %c0_10 = arith.constant 0 : index
    %c0_11 = arith.constant 0 : index
    %8 = vector.load %arg4[%c0_10, %c0_11] : memref<24x32xf32, #tpu.memory_space<vmem>>, vector<24x32xf32>
    %cst_12 = arith.constant dense<0.000000e+00> : vector<32x32xf32>
    %9 = tpu.matmul %3, %8, %cst_12 {dimension_numbers = #tpu.dot_dimension_numbers<[1], [0], [0], [1], [0, 0, 1, 1], [], []>} : vector<32x24xf32>, vector<24x32xf32>, vector<32x32xf32> -> vector<32x32xf32>
    %c0_13 = arith.constant 0 : index
    %c0_14 = arith.constant 0 : index
    %10 = vector.load %arg5[%c0_13, %c0_14] : memref<20x32xf32, #tpu.memory_space<vmem>>, vector<20x32xf32>
    %cst_15 = arith.constant dense<0.000000e+00> : vector<32x32xf32>
    %11 = tpu.matmul %5, %10, %cst_15 {dimension_numbers = #tpu.dot_dimension_numbers<[1], [0], [0], [1], [0, 0, 1, 1], [], []>} : vector<32x20xf32>, vector<20x32xf32>, vector<32x32xf32> -> vector<32x32xf32>
    %12 = vector.shape_cast %7 : vector<16x32xf32> to vector<2x8x32xf32>
    %13 = vector.shape_cast %9 : vector<32x32xf32> to vector<2x16x32xf32>
    %14 = vector.shape_cast %11 : vector<32x32xf32> to vector<2x16x32xf32>
    %15 = vector.extract_strided_slice %12 {offsets = [0, 0, 0], sizes = [2, 8, 4], strides = [1, 1, 1]} : vector<2x8x32xf32> to vector<2x8x4xf32>
    %16 = vector.extract_strided_slice %12 {offsets = [0, 0, 4], sizes = [2, 8, 4], strides = [1, 1, 1]} : vector<2x8x32xf32> to vector<2x8x4xf32>
    %17 = vector.extract_strided_slice %12 {offsets = [0, 0, 8], sizes = [2, 8, 4], strides = [1, 1, 1]} : vector<2x8x32xf32> to vector<2x8x4xf32>
    %18 = vector.extract_strided_slice %12 {offsets = [0, 0, 12], sizes = [2, 8, 4], strides = [1, 1, 1]} : vector<2x8x32xf32> to vector<2x8x4xf32>
    %19 = vector.extract_strided_slice %12 {offsets = [0, 0, 16], sizes = [2, 8, 4], strides = [1, 1, 1]} : vector<2x8x32xf32> to vector<2x8x4xf32>
    %20 = vector.extract_strided_slice %12 {offsets = [0, 0, 20], sizes = [2, 8, 4], strides = [1, 1, 1]} : vector<2x8x32xf32> to vector<2x8x4xf32>
    %21 = vector.extract_strided_slice %12 {offsets = [0, 0, 24], sizes = [2, 8, 4], strides = [1, 1, 1]} : vector<2x8x32xf32> to vector<2x8x4xf32>
    %22 = vector.extract_strided_slice %12 {offsets = [0, 0, 28], sizes = [2, 8, 4], strides = [1, 1, 1]} : vector<2x8x32xf32> to vector<2x8x4xf32>
    %23 = tpu.concatenate %15, %16, %17, %18, %19, %20, %21, %22 in 0 : vector<2x8x4xf32>, vector<2x8x4xf32>, vector<2x8x4xf32>, vector<2x8x4xf32>, vector<2x8x4xf32>, vector<2x8x4xf32>, vector<2x8x4xf32>, vector<2x8x4xf32> -> vector<16x8x4xf32>
    %cst_16 = arith.constant 0.176776692 : f32
    %24 = vector.broadcast %cst_16 : f32 to vector<16x8x4xf32>
    %25 = arith.mulf %23, %24 : vector<16x8x4xf32>
    %26 = vector.extract_strided_slice %13 {offsets = [0, 0, 0], sizes = [2, 16, 4], strides = [1, 1, 1]} : vector<2x16x32xf32> to vector<2x16x4xf32>
    %27 = vector.extract_strided_slice %13 {offsets = [0, 0, 4], sizes = [2, 16, 4], strides = [1, 1, 1]} : vector<2x16x32xf32> to vector<2x16x4xf32>
    %28 = vector.extract_strided_slice %13 {offsets = [0, 0, 8], sizes = [2, 16, 4], strides = [1, 1, 1]} : vector<2x16x32xf32> to vector<2x16x4xf32>
    %29 = vector.extract_strided_slice %13 {offsets = [0, 0, 12], sizes = [2, 16, 4], strides = [1, 1, 1]} : vector<2x16x32xf32> to vector<2x16x4xf32>
    %30 = vector.extract_strided_slice %13 {offsets = [0, 0, 16], sizes = [2, 16, 4], strides = [1, 1, 1]} : vector<2x16x32xf32> to vector<2x16x4xf32>
    %31 = vector.extract_strided_slice %13 {offsets = [0, 0, 20], sizes = [2, 16, 4], strides = [1, 1, 1]} : vector<2x16x32xf32> to vector<2x16x4xf32>
    %32 = vector.extract_strided_slice %13 {offsets = [0, 0, 24], sizes = [2, 16, 4], strides = [1, 1, 1]} : vector<2x16x32xf32> to vector<2x16x4xf32>
    %33 = vector.extract_strided_slice %13 {offsets = [0, 0, 28], sizes = [2, 16, 4], strides = [1, 1, 1]} : vector<2x16x32xf32> to vector<2x16x4xf32>
    %34 = tpu.concatenate %26, %27, %28, %29, %30, %31, %32, %33 in 0 : vector<2x16x4xf32>, vector<2x16x4xf32>, vector<2x16x4xf32>, vector<2x16x4xf32>, vector<2x16x4xf32>, vector<2x16x4xf32>, vector<2x16x4xf32>, vector<2x16x4xf32> -> vector<16x16x4xf32>
    %35 = vector.extract_strided_slice %14 {offsets = [0, 0, 0], sizes = [2, 16, 4], strides = [1, 1, 1]} : vector<2x16x32xf32> to vector<2x16x4xf32>
    %36 = vector.extract_strided_slice %14 {offsets = [0, 0, 4], sizes = [2, 16, 4], strides = [1, 1, 1]} : vector<2x16x32xf32> to vector<2x16x4xf32>
    %37 = vector.extract_strided_slice %14 {offsets = [0, 0, 8], sizes = [2, 16, 4], strides = [1, 1, 1]} : vector<2x16x32xf32> to vector<2x16x4xf32>
    %38 = vector.extract_strided_slice %14 {offsets = [0, 0, 12], sizes = [2, 16, 4], strides = [1, 1, 1]} : vector<2x16x32xf32> to vector<2x16x4xf32>
    %39 = vector.extract_strided_slice %14 {offsets = [0, 0, 16], sizes = [2, 16, 4], strides = [1, 1, 1]} : vector<2x16x32xf32> to vector<2x16x4xf32>
    %40 = vector.extract_strided_slice %14 {offsets = [0, 0, 20], sizes = [2, 16, 4], strides = [1, 1, 1]} : vector<2x16x32xf32> to vector<2x16x4xf32>
    %41 = vector.extract_strided_slice %14 {offsets = [0, 0, 24], sizes = [2, 16, 4], strides = [1, 1, 1]} : vector<2x16x32xf32> to vector<2x16x4xf32>
    %42 = vector.extract_strided_slice %14 {offsets = [0, 0, 28], sizes = [2, 16, 4], strides = [1, 1, 1]} : vector<2x16x32xf32> to vector<2x16x4xf32>
    %43 = tpu.concatenate %35, %36, %37, %38, %39, %40, %41, %42 in 0 : vector<2x16x4xf32>, vector<2x16x4xf32>, vector<2x16x4xf32>, vector<2x16x4xf32>, vector<2x16x4xf32>, vector<2x16x4xf32>, vector<2x16x4xf32>, vector<2x16x4xf32> -> vector<16x16x4xf32>
    "tpu.trace_start"() <{level = 10 : i32, message = "nqd,nkd->nqk"}> : () -> ()
    %cst_17 = arith.constant dense<0.000000e+00> : vector<16x8x16xf32>
    %44 = tpu.matmul %25, %34, %cst_17 {dimension_numbers = #tpu.dot_dimension_numbers<[2], [2], [1], [1], [0, 0, 0, 1, 1, 1], [0], [0]>} : vector<16x8x4xf32>, vector<16x16x4xf32>, vector<16x8x16xf32> -> vector<16x8x16xf32>
    "tpu.trace_stop"() : () -> ()
    %cst_18 = arith.constant dense<0xFF800000> : vector<16x8xf32>
    %45 = vector.multi_reduction <maximumf>, %44, %cst_18 [2] : vector<16x8x16xf32> to vector<16x8xf32>
    %46 = vector.shape_cast %45 : vector<16x8xf32> to vector<16x8x1xf32>
    %47 = vector.broadcast %46 : vector<16x8x1xf32> to vector<16x8x16xf32>
    %48 = arith.subf %44, %47 : vector<16x8x16xf32>
    %49 = math.exp %48 : vector<16x8x16xf32>
    %cst_19 = arith.constant dense<0.000000e+00> : vector<16x8xf32>
    %50 = vector.multi_reduction <add>, %49, %cst_19 [2] : vector<16x8x16xf32> to vector<16x8xf32>
    %51 = vector.shape_cast %50 : vector<16x8xf32> to vector<16x8x1xf32>
    %52 = tpu.reciprocal %51 {approx = true} : vector<16x8x1xf32> -> vector<16x8x1xf32>
    %53 = vector.broadcast %52 : vector<16x8x1xf32> to vector<16x8x16xf32>
    %54 = arith.mulf %49, %53 : vector<16x8x16xf32>
    "tpu.trace_start"() <{level = 10 : i32, message = "nqk,nkd->nqd"}> : () -> ()
    %cst_20 = arith.constant dense<0.000000e+00> : vector<16x8x4xf32>
    %55 = tpu.matmul %54, %43, %cst_20 {dimension_numbers = #tpu.dot_dimension_numbers<[2], [1], [1], [2], [0, 0, 0, 1, 1, 2], [0], [0]>} : vector<16x8x16xf32>, vector<16x16x4xf32>, vector<16x8x4xf32> -> vector<16x8x4xf32>
    "tpu.trace_stop"() : () -> ()
    %56 = vector.extract_strided_slice %55 {offsets = [0, 0, 0], sizes = [2, 8, 4], strides = [1, 1, 1]} : vector<16x8x4xf32> to vector<2x8x4xf32>
    %57 = vector.extract_strided_slice %55 {offsets = [2, 0, 0], sizes = [2, 8, 4], strides = [1, 1, 1]} : vector<16x8x4xf32> to vector<2x8x4xf32>
    %58 = vector.extract_strided_slice %55 {offsets = [4, 0, 0], sizes = [2, 8, 4], strides = [1, 1, 1]} : vector<16x8x4xf32> to vector<2x8x4xf32>
    %59 = vector.extract_strided_slice %55 {offsets = [6, 0, 0], sizes = [2, 8, 4], strides = [1, 1, 1]} : vector<16x8x4xf32> to vector<2x8x4xf32>
    %60 = vector.extract_strided_slice %55 {offsets = [8, 0, 0], sizes = [2, 8, 4], strides = [1, 1, 1]} : vector<16x8x4xf32> to vector<2x8x4xf32>
    %61 = vector.extract_strided_slice %55 {offsets = [10, 0, 0], sizes = [2, 8, 4], strides = [1, 1, 1]} : vector<16x8x4xf32> to vector<2x8x4xf32>
    %62 = vector.extract_strided_slice %55 {offsets = [12, 0, 0], sizes = [2, 8, 4], strides = [1, 1, 1]} : vector<16x8x4xf32> to vector<2x8x4xf32>
    %63 = vector.extract_strided_slice %55 {offsets = [14, 0, 0], sizes = [2, 8, 4], strides = [1, 1, 1]} : vector<16x8x4xf32> to vector<2x8x4xf32>
    %64 = tpu.concatenate %56, %57, %58, %59, %60, %61, %62, %63 in 2 : vector<2x8x4xf32>, vector<2x8x4xf32>, vector<2x8x4xf32>, vector<2x8x4xf32>, vector<2x8x4xf32>, vector<2x8x4xf32>, vector<2x8x4xf32>, vector<2x8x4xf32> -> vector<2x8x32xf32>
    %65 = vector.shape_cast %64 : vector<2x8x32xf32> to vector<16x32xf32>
    %66 = arith.addf %7, %65 : vector<16x32xf32>
    %c0_21 = arith.constant 0 : index
    %c0_22 = arith.constant 0 : index
    %67 = vector.load %arg6[%c0_21, %c0_22] : memref<32x32xf32, #tpu.memory_space<vmem>>, vector<32x32xf32>
    %cst_23 = arith.constant dense<0.000000e+00> : vector<16x32xf32>
    %68 = tpu.matmul %66, %67, %cst_23 {dimension_numbers = #tpu.dot_dimension_numbers<[1], [0], [0], [1], [0, 0, 1, 1], [], []>} : vector<16x32xf32>, vector<32x32xf32>, vector<16x32xf32> -> vector<16x32xf32>
    %c0_24 = arith.constant 0 : index
    %c0_25 = arith.constant 0 : index
    %69 = vector.load %arg7[%c0_24, %c0_25] : memref<1x32xf32, #tpu.memory_space<vmem>>, vector<1x32xf32>
    %70 = vector.broadcast %69 : vector<1x32xf32> to vector<16x32xf32>
    %71 = arith.addf %68, %70 : vector<16x32xf32>
    %cst_26 = arith.constant 0.000000e+00 : f32
    %72 = vector.broadcast %cst_26 : f32 to vector<16x32xf32>
    %73 = arith.maximumf %71, %72 : vector<16x32xf32>
    %74 = arith.addf %66, %73 : vector<16x32xf32>
    %c0_27 = arith.constant 0 : index
    %c0_28 = arith.constant 0 : index
    %75 = vector.load %arg8[%c0_27, %c0_28] : memref<16x32xf32, #tpu.memory_space<vmem>>, vector<16x32xf32>
    tpu.vector_store %arg8[%c0_27, %c0_28], %74 {strides = array<i32>} : memref<16x32xf32, #tpu.memory_space<vmem>>, vector<16x32xf32>,
    return
  }
}

</mosaic_0001>

<llo_original>
// kernel: tpu_custom_call.1
$region0: #{tpu_custom_call.1}
  #allocation0 [shape = 'u32[]', space=smem, size = 0x4, offset = 0x4, fixed_abs, tag = 'smem constant byte address 0x4 - core index']
  #allocation1 [shape = 'u32[72,128]{1,0:T(1,128)}', space=vmem, size = 0x9000, scoped, tag = 'internal scratch']
  %s0 = inlined_call_operand.hbm [shape: f32[2,8,16], index: 0, kind: input, shape index: {}]
  %s1 = inlined_call_operand.hbm [shape: f32[2,16,24], index: 1, kind: input, shape index: {}]
  %s2 = inlined_call_operand.hbm [shape: f32[2,16,20], index: 2, kind: input, shape index: {}]
  %s3 = inlined_call_operand.hbm [shape: f32[16,32], index: 3, kind: input, shape index: {}]
  %s4 = inlined_call_operand.hbm [shape: f32[24,32], index: 4, kind: input, shape index: {}]
  %s5 = inlined_call_operand.hbm [shape: f32[20,32], index: 5, kind: input, shape index: {}]
  %s6 = inlined_call_operand.hbm [shape: f32[32,32], index: 6, kind: input, shape index: {}]
  %s7 = inlined_call_operand.vmem [shape: f32[1,32], index: 7, kind: input, shape index: {}]
  %s8 = inlined_call_operand.hbm [shape: f32[16,32], index: 8, kind: output, shape index: {}]
  %s9 = sld [smem:[#allocation0]]
  $region70: #{tpu_custom_call.1} parent=0
    _
  %s11 = ssub.s32 1, %s9
  %s12 = scalar_select 0, %s11, %s9
  $region1: #{tpu_custom_call.1} parent=0
    #allocation2 [shape = 'u8[8192]{0}', space=vmem, size = 0x2000, scoped, tag = 'input window, operand 0, single buffered']
    #allocation3 [shape = 's32[1]{0}', space=sflag, size = 0x4, scoped, tag = 'scoped memory for tpu_custom_call.1']
    #allocation4 [shape = 's32[1]{0}', space=sflag, size = 0x4, scoped, tag = 'scoped memory for tpu_custom_call.1']
    #allocation5 [shape = 'u8[16384]{0}', space=vmem, size = 0x4000, scoped, tag = 'input window, operand 1, single buffered']
    #allocation6 [shape = 's32[1]{0}', space=sflag, size = 0x4, scoped, tag = 'scoped memory for tpu_custom_call.1']
    #allocation7 [shape = 'u8[16384]{0}', space=vmem, size = 0x4000, scoped, tag = 'input window, operand 2, single buffered']
    #allocation8 [shape = 'u8[8192]{0}', space=vmem, size = 0x2000, scoped, tag = 'input window, operand 3, single buffered']
    #allocation9 [shape = 's32[1]{0}', space=sflag, size = 0x4, scoped, tag = 'scoped memory for tpu_custom_call.1']
    #allocation10 [shape = 'u8[12288]{0}', space=vmem, size = 0x3000, scoped, tag = 'input window, operand 4, single buffered']
    #allocation11 [shape = 'u8[12288]{0}', space=vmem, size = 0x3000, scoped, tag = 'input window, operand 5, single buffered']
    #allocation12 [shape = 's32[1]{0}', space=sflag, size = 0x4, scoped, tag = 'scoped memory for tpu_custom_call.1']
    #allocation13 [shape = 'u8[16384]{0}', space=vmem, size = 0x4000, scoped, tag = 'input window, operand 6, single buffered']
    #allocation14 [shape = 'u8[8192]{0}', space=vmem, size = 0x2000, scoped, tag = 'output window, operand 0, single buffered']
    %13 = vsyncpa [#allocation3], 0
    %14 = vsyncpa [#allocation6], 0
    %15 = vsyncpa [#allocation9], 0
    %16 = vsyncpa [#allocation12], 0
    %17 = vsyncpa [#allocation4], 0
    // Predicated region
    $region2: #{tpu_custom_call.1} parent=1 // pred_check
      _
    $region3: #{tpu_custom_call.1} parent=1 // pred_check_branch
      %19 = sbr.rel (0) target = $region5
    $region4: #{tpu_custom_call.1} parent=1 // pred_region
      %21 = vsyncadd [#allocation3], 0
      %s22 = sshll.u32 %s0, 4
      %s23 = int_to_ptr.hbm [resolvable:$true] %s22
      %s24 = sshll.u32 [#allocation2], 4
      %s25 = int_to_ptr.vmem [resolvable:$true] %s24
      %30 = dma.hbm_to_vmem [thread:$0]  %s23, 256, %s25, [#allocation3], 128, 128, 8
    $region5: #{tpu_custom_call.1} parent=1 // pred_fallthru
      _
    // Predicated region
    $region6: #{tpu_custom_call.1} parent=1 // pred_check
      _
    $region7: #{tpu_custom_call.1} parent=1 // pred_check_branch
      %32 = sbr.rel (0) target = $region9
    $region8: #{tpu_custom_call.1} parent=1 // pred_region
      %34 = vsyncadd [#allocation6], 0
      %s35 = sshll.u32 %s1, 4
      %s36 = int_to_ptr.hbm [resolvable:$true] %s35
      %s37 = sshll.u32 [#allocation5], 4
      %s38 = int_to_ptr.vmem [resolvable:$true] %s37
      %43 = dma.hbm_to_vmem [thread:$0]  %s36, 512, %s38, [#allocation6], 128, 128, 8
    $region9: #{tpu_custom_call.1} parent=1 // pred_fallthru
      _
    // Predicated region
    $region10: #{tpu_custom_call.1} parent=1 // pred_check
      _
    $region11: #{tpu_custom_call.1} parent=1 // pred_check_branch
      %45 = sbr.rel (0) target = $region13
    $region12: #{tpu_custom_call.1} parent=1 // pred_region
      %47 = vsyncadd [#allocation6], 0
      %s48 = sshll.u32 %s2, 4
      %s49 = int_to_ptr.hbm [resolvable:$true] %s48
      %s50 = sshll.u32 [#allocation7], 4
      %s51 = int_to_ptr.vmem [resolvable:$true] %s50
      %56 = dma.hbm_to_vmem [thread:$0]  %s49, 512, %s51, [#allocation6], 128, 128, 8
    $region13: #{tpu_custom_call.1} parent=1 // pred_fallthru
      _
    // Predicated region
    $region14: #{tpu_custom_call.1} parent=1 // pred_check
      _
    $region15: #{tpu_custom_call.1} parent=1 // pred_check_branch
      %58 = sbr.rel (0) target = $region17
    $region16: #{tpu_custom_call.1} parent=1 // pred_region
      %60 = vsyncadd [#allocation9], 0
      %s61 = sshll.u32 %s3, 4
      %s62 = int_to_ptr.hbm [resolvable:$true] %s61
      %s63 = sshll.u32 [#allocation8], 4
      %s64 = int_to_ptr.vmem [resolvable:$true] %s63
      %69 = dma.hbm_to_vmem [thread:$0]  %s62, 256, %s64, [#allocation9], 128, 128, 8
    $region17: #{tpu_custom_call.1} parent=1 // pred_fallthru
      _
    // Predicated region
    $region18: #{tpu_custom_call.1} parent=1 // pred_check
      _
    $region19: #{tpu_custom_call.1} parent=1 // pred_check_branch
      %71 = sbr.rel (0) target = $region21
    $region20: #{tpu_custom_call.1} parent=1 // pred_region
      %73 = vsyncadd [#allocation9], 0
      %s74 = sshll.u32 %s4, 4
      %s75 = int_to_ptr.hbm [resolvable:$true] %s74
      %s76 = sshll.u32 [#allocation10], 4
      %s77 = int_to_ptr.vmem [resolvable:$true] %s76
      %82 = dma.hbm_to_vmem [thread:$0]  %s75, 384, %s77, [#allocation9], 128, 128, 8
    $region21: #{tpu_custom_call.1} parent=1 // pred_fallthru
      _
    // Predicated region
    $region22: #{tpu_custom_call.1} parent=1 // pred_check
      _
    $region23: #{tpu_custom_call.1} parent=1 // pred_check_branch
      %84 = sbr.rel (0) target = $region25
    $region24: #{tpu_custom_call.1} parent=1 // pred_region
      %86 = vsyncadd [#allocation12], 0
      %s87 = sshll.u32 %s5, 4
      %s88 = int_to_ptr.hbm [resolvable:$true] %s87
      %s89 = sshll.u32 [#allocation11], 4
      %s90 = int_to_ptr.vmem [resolvable:$true] %s89
      %95 = dma.hbm_to_vmem [thread:$0]  %s88, 384, %s90, [#allocation12], 128, 128, 8
    $region25: #{tpu_custom_call.1} parent=1 // pred_fallthru
      _
    // Predicated region
    $region26: #{tpu_custom_call.1} parent=1 // pred_check
      _
    $region27: #{tpu_custom_call.1} parent=1 // pred_check_branch
      %97 = sbr.rel (0) target = $region29
    $region28: #{tpu_custom_call.1} parent=1 // pred_region
      %99 = vsyncadd [#allocation12], 0
      %s100 = sshll.u32 %s6, 4
      %s101 = int_to_ptr.hbm [resolvable:$true] %s100
      %s102 = sshll.u32 [#allocation13], 4
      %s103 = int_to_ptr.vmem [resolvable:$true] %s102
      %108 = dma.hbm_to_vmem [thread:$0]  %s101, 512, %s103, [#allocation12], 128, 128, 8
    $region29: #{tpu_custom_call.1} parent=1 // pred_fallthru
      _
    // Predicated region
    $region30: #{tpu_custom_call.1} parent=1 // pred_check
      _
    $region31: #{tpu_custom_call.1} parent=1 // pred_check_branch
      %110 = sbr.rel (0) target = $region33
    $region32: #{tpu_custom_call.1} parent=1 // pred_region
      _
    $region33: #{tpu_custom_call.1} parent=1 // pred_fallthru
      _
    // Predicated region
    $region34: #{tpu_custom_call.1} parent=1 // pred_check
      _
    $region35: #{tpu_custom_call.1} parent=1 // pred_check_branch
      %112 = sbr.rel (0) target = $region37
    $region36: #{tpu_custom_call.1} parent=1 // pred_region
      %114 = dma.done [#allocation3], 256
    $region37: #{tpu_custom_call.1} parent=1 // pred_fallthru
      _
    // Predicated region
    $region38: #{tpu_custom_call.1} parent=1 // pred_check
      _
    $region39: #{tpu_custom_call.1} parent=1 // pred_check_branch
      %116 = sbr.rel (0) target = $region41
    $region40: #{tpu_custom_call.1} parent=1 // pred_region
      %118 = dma.done [#allocation6], 512
    $region41: #{tpu_custom_call.1} parent=1 // pred_fallthru
      _
    // Predicated region
    $region42: #{tpu_custom_call.1} parent=1 // pred_check
      _
    $region43: #{tpu_custom_call.1} parent=1 // pred_check_branch
      %120 = sbr.rel (0) target = $region45
    $region44: #{tpu_custom_call.1} parent=1 // pred_region
      %122 = dma.done [#allocation6], 512
    $region45: #{tpu_custom_call.1} parent=1 // pred_fallthru
      _
    // Predicated region
    $region46: #{tpu_custom_call.1} parent=1 // pred_check
      _
    $region47: #{tpu_custom_call.1} parent=1 // pred_check_branch
      %124 = sbr.rel (0) target = $region49
    $region48: #{tpu_custom_call.1} parent=1 // pred_region
      %126 = dma.done [#allocation9], 256
    $region49: #{tpu_custom_call.1} parent=1 // pred_fallthru
      _
    // Predicated region
    $region50: #{tpu_custom_call.1} parent=1 // pred_check
      _
    $region51: #{tpu_custom_call.1} parent=1 // pred_check_branch
      %128 = sbr.rel (0) target = $region53
    $region52: #{tpu_custom_call.1} parent=1 // pred_region
      %130 = dma.done [#allocation9], 384
    $region53: #{tpu_custom_call.1} parent=1 // pred_fallthru
      _
    // Predicated region
    $region54: #{tpu_custom_call.1} parent=1 // pred_check
      _
    $region55: #{tpu_custom_call.1} parent=1 // pred_check_branch
      %132 = sbr.rel (0) target = $region57
    $region56: #{tpu_custom_call.1} parent=1 // pred_region
      %134 = dma.done [#allocation12], 384
    $region57: #{tpu_custom_call.1} parent=1 // pred_fallthru
      _
    // Predicated region
    $region58: #{tpu_custom_call.1} parent=1 // pred_check
      _
    $region59: #{tpu_custom_call.1} parent=1 // pred_check_branch
      %136 = sbr.rel (0) target = $region61
    $region60: #{tpu_custom_call.1} parent=1 // pred_region
      %138 = dma.done [#allocation12], 512
    $region61: #{tpu_custom_call.1} parent=1 // pred_fallthru
      _
    %v139 = vld [vmem:[#allocation2] sm:$0xff]
    %v140 = vld [vmem:[#allocation2 + $0x8] sm:$0xff]
    %v141 = vld [vmem:[#allocation5] sm:$0xff]
    %v142 = vld [vmem:[#allocation5 + $0x8] sm:$0xff]
    %v143 = vld [vmem:[#allocation5 + $0x10] sm:$0xff]
    %v144 = vld [vmem:[#allocation5 + $0x18] sm:$0xff]
    %v145 = vld [vmem:[#allocation7] sm:$0xff]
    %v146 = vld [vmem:[#allocation7 + $0x8] sm:$0xff]
    %v147 = vld [vmem:[#allocation7 + $0x10] sm:$0xff]
    %v148 = vld [vmem:[#allocation7 + $0x18] sm:$0xff]
    %v149 = vld [vmem:[#allocation8] sm:$0xff]
    %v150 = vld [vmem:[#allocation8 + $0x8] sm:$0xff]
    %vm151 = vcmask 130048
    %v153 = vsel %vm151, %v139, 0
    %v156 = vsel %vm151, %v140, 0
    %158 = vmatpush.msra.mxu0 0.0
    %159 = vmatpush.msra.mxu0 0.0
    %160 = vmatpush.msra.mxu0 0.0
    %161 = vmatpush.msra.mxu0 0.0
    %162 = vmatpush.msra.mxu0 0.0
    %163 = vmatpush.msra.mxu0 0.0
    %164 = vmatpush.msra.mxu0 0.0
    %165 = vmatpush.msra.mxu0 0.0
    %166 = vmatpush.msra.mxu0 0.0
    %167 = vmatpush.msra.mxu0 0.0
    %168 = vmatpush.msra.mxu0 0.0
    %169 = vmatpush.msra.mxu0 0.0
    %170 = vmatpush.msra.mxu0 0.0
    %171 = vmatpush.msra.mxu0 0.0
    %172 = vmatpush.msra.mxu0 %v150
    %173 = vmatpush.msra.mxu0 %v149
    %174 = vmatmul.f32.gmra.mxu0 %v153
    %v175 = vpop.f32.mrf.mxu0
    %v176 = vadd.f32 0.0, %v175
    %177 = vmatmul.f32.gmra.mxu0 %v156
    %v178 = vpop.f32.mrf.mxu0
    %v179 = vadd.f32 0.0, %v178
    %180 = vdwg.mxu0
    %v181 = vld [vmem:[#allocation10] sm:$0xff]
    %v182 = vld [vmem:[#allocation10 + $0x8] sm:$0xff]
    %v183 = vld [vmem:[#allocation10 + $0x10] sm:$0xff]
    %vm184 = vcmask 195584
    %v186 = vsel %vm184, %v141, 0
    %v189 = vsel %vm184, %v142, 0
    %v192 = vsel %vm184, %v143, 0
    %v195 = vsel %vm184, %v144, 0
    %197 = vmatpush.msra.mxu0 0.0
    %198 = vmatpush.msra.mxu0 0.0
    %199 = vmatpush.msra.mxu0 0.0
    %200 = vmatpush.msra.mxu0 0.0
    %201 = vmatpush.msra.mxu0 0.0
    %202 = vmatpush.msra.mxu0 0.0
    %203 = vmatpush.msra.mxu0 0.0
    %204 = vmatpush.msra.mxu0 0.0
    %205 = vmatpush.msra.mxu0 0.0
    %206 = vmatpush.msra.mxu0 0.0
    %207 = vmatpush.msra.mxu0 0.0
    %208 = vmatpush.msra.mxu0 0.0
    %209 = vmatpush.msra.mxu0 0.0
    %210 = vmatpush.msra.mxu0 %v183
    %211 = vmatpush.msra.mxu0 %v182
    %212 = vmatpush.msra.mxu0 %v181
    %213 = vmatmul.f32.gmra.mxu0 %v186
    %v214 = vpop.f32.mrf.mxu0
    %v215 = vadd.f32 0.0, %v214
    %216 = vmatmul.f32.gmra.mxu0 %v189
    %v217 = vpop.f32.mrf.mxu0
    %v218 = vadd.f32 0.0, %v217
    %219 = vmatmul.f32.gmra.mxu0 %v192
    %v220 = vpop.f32.mrf.mxu0
    %v221 = vadd.f32 0.0, %v220
    %222 = vmatmul.f32.gmra.mxu0 %v195
    %v223 = vpop.f32.mrf.mxu0
    %v224 = vadd.f32 0.0, %v223
    %225 = vdwg.mxu0
    %v226 = vld [vmem:[#allocation11] sm:$0xff]
    %v227 = vld [vmem:[#allocation11 + $0x8] sm:$0xff]
    %v228 = vld [vmem:[#allocation11 + $0x10] sm:$0xf]
    %vm229 = vcmask 162816
    %v231 = vsel %vm229, %v145, 0
    %v234 = vsel %vm229, %v146, 0
    %v237 = vsel %vm229, %v147, 0
    %v240 = vsel %vm229, %v148, 0
    %vm242 = vcmask 1043456
    %v244 = vsel %vm242, %v228, 0
    %246 = vmatpush.msra.mxu0 0.0
    %247 = vmatpush.msra.mxu0 0.0
    %248 = vmatpush.msra.mxu0 0.0
    %249 = vmatpush.msra.mxu0 0.0
    %250 = vmatpush.msra.mxu0 0.0
    %251 = vmatpush.msra.mxu0 0.0
    %252 = vmatpush.msra.mxu0 0.0
    %253 = vmatpush.msra.mxu0 0.0
    %254 = vmatpush.msra.mxu0 0.0
    %255 = vmatpush.msra.mxu0 0.0
    %256 = vmatpush.msra.mxu0 0.0
    %257 = vmatpush.msra.mxu0 0.0
    %258 = vmatpush.msra.mxu0 0.0
    %259 = vmatpush.msra.mxu0 %v244
    %260 = vmatpush.msra.mxu0 %v227
    %261 = vmatpush.msra.mxu0 %v226
    %262 = vmatmul.f32.gmra.mxu0 %v231
    %v263 = vpop.f32.mrf.mxu0
    %v264 = vadd.f32 0.0, %v263
    %265 = vmatmul.f32.gmra.mxu0 %v234
    %v266 = vpop.f32.mrf.mxu0
    %v267 = vadd.f32 0.0, %v266
    %268 = vmatmul.f32.gmra.mxu0 %v237
    %v269 = vpop.f32.mrf.mxu0
    %v270 = vadd.f32 0.0, %v269
    %271 = vmatmul.f32.gmra.mxu0 %v240
    %v272 = vpop.f32.mrf.mxu0
    %v273 = vadd.f32 0.0, %v272
    %274 = vdwg.mxu0
    %277 = vrot.lane.b32.xlu0 %v176, 124
    %v278 = vpop.permute.xlu0 %277
    %279 = vrot.lane.b32.xlu0 %v179, 124
    %v280 = vpop.permute.xlu0 %279
    %283 = vrot.lane.b32.xlu0 %v176, 120
    %v284 = vpop.permute.xlu0 %283
    %285 = vrot.lane.b32.xlu0 %v179, 120
    %v286 = vpop.permute.xlu0 %285
    %289 = vrot.lane.b32.xlu0 %v176, 116
    %v290 = vpop.permute.xlu0 %289
    %291 = vrot.lane.b32.xlu0 %v179, 116
    %v292 = vpop.permute.xlu0 %291
    %295 = vrot.lane.b32.xlu0 %v176, 112
    %v296 = vpop.permute.xlu0 %295
    %297 = vrot.lane.b32.xlu0 %v179, 112
    %v298 = vpop.permute.xlu0 %297
    %301 = vrot.lane.b32.xlu0 %v176, 108
    %v302 = vpop.permute.xlu0 %301
    %303 = vrot.lane.b32.xlu0 %v179, 108
    %v304 = vpop.permute.xlu0 %303
    %307 = vrot.lane.b32.xlu0 %v176, 104
    %v308 = vpop.permute.xlu0 %307
    %309 = vrot.lane.b32.xlu0 %v179, 104
    %v310 = vpop.permute.xlu0 %309
    %313 = vrot.lane.b32.xlu0 %v176, 100
    %v314 = vpop.permute.xlu0 %313
    %315 = vrot.lane.b32.xlu0 %v179, 100
    %v316 = vpop.permute.xlu0 %315
    %v319 = vmul.f32 %v176, 0.17677669
    %v320 = vmul.f32 %v179, 0.17677669
    %v321 = vmul.f32 %v278, 0.17677669
    %v322 = vmul.f32 %v280, 0.17677669
    %v323 = vmul.f32 %v284, 0.17677669
    %v324 = vmul.f32 %v286, 0.17677669
    %v325 = vmul.f32 %v290, 0.17677669
    %v326 = vmul.f32 %v292, 0.17677669
    %v327 = vmul.f32 %v296, 0.17677669
    %v328 = vmul.f32 %v298, 0.17677669
    %v329 = vmul.f32 %v302, 0.17677669
    %v330 = vmul.f32 %v304, 0.17677669
    %v331 = vmul.f32 %v308, 0.17677669
    %v332 = vmul.f32 %v310, 0.17677669
    %v333 = vmul.f32 %v314, 0.17677669
    %v334 = vmul.f32 %v316, 0.17677669
    %339 = vrot.lane.b32.xlu0 %v215, 124
    %v340 = vpop.permute.xlu0 %339
    %341 = vrot.lane.b32.xlu0 %v218, 124
    %v342 = vpop.permute.xlu0 %341
    %343 = vrot.lane.b32.xlu0 %v221, 124
    %v344 = vpop.permute.xlu0 %343
    %345 = vrot.lane.b32.xlu0 %v224, 124
    %v346 = vpop.permute.xlu0 %345
    %347 = vrot.lane.b32.xlu0 %v215, 120
    %v348 = vpop.permute.xlu0 %347
    %349 = vrot.lane.b32.xlu0 %v218, 120
    %v350 = vpop.permute.xlu0 %349
    %351 = vrot.lane.b32.xlu0 %v221, 120
    %v352 = vpop.permute.xlu0 %351
    %353 = vrot.lane.b32.xlu0 %v224, 120
    %v354 = vpop.permute.xlu0 %353
    %355 = vrot.lane.b32.xlu0 %v215, 116
    %v356 = vpop.permute.xlu0 %355
    %357 = vrot.lane.b32.xlu0 %v218, 116
    %v358 = vpop.permute.xlu0 %357
    %359 = vrot.lane.b32.xlu0 %v221, 116
    %v360 = vpop.permute.xlu0 %359
    %361 = vrot.lane.b32.xlu0 %v224, 116
    %v362 = vpop.permute.xlu0 %361
    %363 = vrot.lane.b32.xlu0 %v215, 112
    %v364 = vpop.permute.xlu0 %363
    %365 = vrot.lane.b32.xlu0 %v218, 112
    %v366 = vpop.permute.xlu0 %365
    %367 = vrot.lane.b32.xlu0 %v221, 112
    %v368 = vpop.permute.xlu0 %367
    %369 = vrot.lane.b32.xlu0 %v224, 112
    %v370 = vpop.permute.xlu0 %369
    %371 = vrot.lane.b32.xlu0 %v215, 108
    %v372 = vpop.permute.xlu0 %371
    %373 = vrot.lane.b32.xlu0 %v218, 108
    %v374 = vpop.permute.xlu0 %373
    %375 = vrot.lane.b32.xlu0 %v221, 108
    %v376 = vpop.permute.xlu0 %375
    %377 = vrot.lane.b32.xlu0 %v224, 108
    %v378 = vpop.permute.xlu0 %377
    %379 = vrot.lane.b32.xlu0 %v215, 104
    %v380 = vpop.permute.xlu0 %379
    %381 = vrot.lane.b32.xlu0 %v218, 104
    %v382 = vpop.permute.xlu0 %381
    %383 = vrot.lane.b32.xlu0 %v221, 104
    %v384 = vpop.permute.xlu0 %383
    %385 = vrot.lane.b32.xlu0 %v224, 104
    %v386 = vpop.permute.xlu0 %385
    %387 = vrot.lane.b32.xlu0 %v215, 100
    %v388 = vpop.permute.xlu0 %387
    %389 = vrot.lane.b32.xlu0 %v218, 100
    %v390 = vpop.permute.xlu0 %389
    %391 = vrot.lane.b32.xlu0 %v221, 100
    %v392 = vpop.permute.xlu0 %391
    %393 = vrot.lane.b32.xlu0 %v224, 100
    %v394 = vpop.permute.xlu0 %393
    %399 = vrot.lane.b32.xlu0 %v264, 124
    %v400 = vpop.permute.xlu0 %399
    %401 = vrot.lane.b32.xlu0 %v267, 124
    %v402 = vpop.permute.xlu0 %401
    %403 = vrot.lane.b32.xlu0 %v270, 124
    %v404 = vpop.permute.xlu0 %403
    %405 = vrot.lane.b32.xlu0 %v273, 124
    %v406 = vpop.permute.xlu0 %405
    %411 = vrot.lane.b32.xlu0 %v264, 120
    %v412 = vpop.permute.xlu0 %411
    %413 = vrot.lane.b32.xlu0 %v267, 120
    %v414 = vpop.permute.xlu0 %413
    %415 = vrot.lane.b32.xlu0 %v270, 120
    %v416 = vpop.permute.xlu0 %415
    %417 = vrot.lane.b32.xlu0 %v273, 120
    %v418 = vpop.permute.xlu0 %417
    %423 = vrot.lane.b32.xlu0 %v264, 116
    %v424 = vpop.permute.xlu0 %423
    %425 = vrot.lane.b32.xlu0 %v267, 116
    %v426 = vpop.permute.xlu0 %425
    %427 = vrot.lane.b32.xlu0 %v270, 116
    %v428 = vpop.permute.xlu0 %427
    %429 = vrot.lane.b32.xlu0 %v273, 116
    %v430 = vpop.permute.xlu0 %429
    %435 = vrot.lane.b32.xlu0 %v264, 112
    %v436 = vpop.permute.xlu0 %435
    %437 = vrot.lane.b32.xlu0 %v267, 112
    %v438 = vpop.permute.xlu0 %437
    %439 = vrot.lane.b32.xlu0 %v270, 112
    %v440 = vpop.permute.xlu0 %439
    %441 = vrot.lane.b32.xlu0 %v273, 112
    %v442 = vpop.permute.xlu0 %441
    %447 = vrot.lane.b32.xlu0 %v264, 108
    %v448 = vpop.permute.xlu0 %447
    %449 = vrot.lane.b32.xlu0 %v267, 108
    %v450 = vpop.permute.xlu0 %449
    %451 = vrot.lane.b32.xlu0 %v270, 108
    %v452 = vpop.permute.xlu0 %451
    %453 = vrot.lane.b32.xlu0 %v273, 108
    %v454 = vpop.permute.xlu0 %453
    %459 = vrot.lane.b32.xlu0 %v264, 104
    %v460 = vpop.permute.xlu0 %459
    %461 = vrot.lane.b32.xlu0 %v267, 104
    %v462 = vpop.permute.xlu0 %461
    %463 = vrot.lane.b32.xlu0 %v270, 104
    %v464 = vpop.permute.xlu0 %463
    %465 = vrot.lane.b32.xlu0 %v273, 104
    %v466 = vpop.permute.xlu0 %465
    %471 = vrot.lane.b32.xlu0 %v264, 100
    %v472 = vpop.permute.xlu0 %471
    %473 = vrot.lane.b32.xlu0 %v267, 100
    %v474 = vpop.permute.xlu0 %473
    %475 = vrot.lane.b32.xlu0 %v270, 100
    %v476 = vpop.permute.xlu0 %475
    %477 = vrot.lane.b32.xlu0 %v273, 100
    %v478 = vpop.permute.xlu0 %477
    %vm483 = vcmask 31744
    %v485 = vsel %vm483, %v319, 0
    %v487 = vsel %vm483, %v215, 0
    %v489 = vsel %vm483, %v218, 0
    %491 = vmatpush.xpose.msra.mxu0 0.0
    %492 = vmatpush.xpose.msra.mxu0 0.0
    %493 = vmatpush.xpose.msra.mxu0 0.0
    %494 = vmatpush.xpose.msra.mxu0 0.0
    %495 = vmatpush.xpose.msra.mxu0 0.0
    %496 = vmatpush.xpose.msra.mxu0 0.0
    %497 = vmatpush.xpose.msra.mxu0 0.0
    %498 = vmatpush.xpose.msra.mxu0 0.0
    %499 = vmatpush.xpose.msra.mxu0 0.0
    %500 = vmatpush.xpose.msra.mxu0 0.0
    %501 = vmatpush.xpose.msra.mxu0 0.0
    %502 = vmatpush.xpose.msra.mxu0 0.0
    %503 = vmatpush.xpose.msra.mxu0 0.0
    %504 = vmatpush.xpose.msra.mxu0 0.0
    %505 = vmatpush.xpose.msra.mxu0 %v489
    %506 = vmatpush.xpose.msra.mxu0 %v487
    %507 = vmatmul.f32.gmra.mxu0 %v485
    %v508 = vpop.f32.mrf.mxu0
    %v509 = vadd.f32 0.0, %v508
    %510 = vdwg.mxu0
    %v512 = vsel %vm483, %v320, 0
    %v514 = vsel %vm483, %v221, 0
    %v516 = vsel %vm483, %v224, 0
    %518 = vmatpush.xpose.msra.mxu0 0.0
    %519 = vmatpush.xpose.msra.mxu0 0.0
    %520 = vmatpush.xpose.msra.mxu0 0.0
    %521 = vmatpush.xpose.msra.mxu0 0.0
    %522 = vmatpush.xpose.msra.mxu0 0.0
    %523 = vmatpush.xpose.msra.mxu0 0.0
    %524 = vmatpush.xpose.msra.mxu0 0.0
    %525 = vmatpush.xpose.msra.mxu0 0.0
    %526 = vmatpush.xpose.msra.mxu0 0.0
    %527 = vmatpush.xpose.msra.mxu0 0.0
    %528 = vmatpush.xpose.msra.mxu0 0.0
    %529 = vmatpush.xpose.msra.mxu0 0.0
    %530 = vmatpush.xpose.msra.mxu0 0.0
    %531 = vmatpush.xpose.msra.mxu0 0.0
    %532 = vmatpush.xpose.msra.mxu0 %v516
    %533 = vmatpush.xpose.msra.mxu0 %v514
    %534 = vmatmul.f32.gmra.mxu0 %v512
    %v535 = vpop.f32.mrf.mxu0
    %v536 = vadd.f32 0.0, %v535
    %537 = vdwg.mxu0
    %v539 = vsel %vm483, %v321, 0
    %v541 = vsel %vm483, %v340, 0
    %v543 = vsel %vm483, %v342, 0
    %545 = vmatpush.xpose.msra.mxu0 0.0
    %546 = vmatpush.xpose.msra.mxu0 0.0
    %547 = vmatpush.xpose.msra.mxu0 0.0
    %548 = vmatpush.xpose.msra.mxu0 0.0
    %549 = vmatpush.xpose.msra.mxu0 0.0
    %550 = vmatpush.xpose.msra.mxu0 0.0
    %551 = vmatpush.xpose.msra.mxu0 0.0
    %552 = vmatpush.xpose.msra.mxu0 0.0
    %553 = vmatpush.xpose.msra.mxu0 0.0
    %554 = vmatpush.xpose.msra.mxu0 0.0
    %555 = vmatpush.xpose.msra.mxu0 0.0
    %556 = vmatpush.xpose.msra.mxu0 0.0
    %557 = vmatpush.xpose.msra.mxu0 0.0
    %558 = vmatpush.xpose.msra.mxu0 0.0
    %559 = vmatpush.xpose.msra.mxu0 %v543
    %560 = vmatpush.xpose.msra.mxu0 %v541
    %561 = vmatmul.f32.gmra.mxu0 %v539
    %v562 = vpop.f32.mrf.mxu0
    %v563 = vadd.f32 0.0, %v562
    %564 = vdwg.mxu0
    %v566 = vsel %vm483, %v322, 0
    %v568 = vsel %vm483, %v344, 0
    %v570 = vsel %vm483, %v346, 0
    %572 = vmatpush.xpose.msra.mxu0 0.0
    %573 = vmatpush.xpose.msra.mxu0 0.0
    %574 = vmatpush.xpose.msra.mxu0 0.0
    %575 = vmatpush.xpose.msra.mxu0 0.0
    %576 = vmatpush.xpose.msra.mxu0 0.0
    %577 = vmatpush.xpose.msra.mxu0 0.0
    %578 = vmatpush.xpose.msra.mxu0 0.0
    %579 = vmatpush.xpose.msra.mxu0 0.0
    %580 = vmatpush.xpose.msra.mxu0 0.0
    %581 = vmatpush.xpose.msra.mxu0 0.0
    %582 = vmatpush.xpose.msra.mxu0 0.0
    %583 = vmatpush.xpose.msra.mxu0 0.0
    %584 = vmatpush.xpose.msra.mxu0 0.0
    %585 = vmatpush.xpose.msra.mxu0 0.0
    %586 = vmatpush.xpose.msra.mxu0 %v570
    %587 = vmatpush.xpose.msra.mxu0 %v568
    %588 = vmatmul.f32.gmra.mxu0 %v566
    %v589 = vpop.f32.mrf.mxu0
    %v590 = vadd.f32 0.0, %v589
    %591 = vdwg.mxu0
    %v593 = vsel %vm483, %v323, 0
    %v595 = vsel %vm483, %v348, 0
    %v597 = vsel %vm483, %v350, 0
    %599 = vmatpush.xpose.msra.mxu0 0.0
    %600 = vmatpush.xpose.msra.mxu0 0.0
    %601 = vmatpush.xpose.msra.mxu0 0.0
    %602 = vmatpush.xpose.msra.mxu0 0.0
    %603 = vmatpush.xpose.msra.mxu0 0.0
    %604 = vmatpush.xpose.msra.mxu0 0.0
    %605 = vmatpush.xpose.msra.mxu0 0.0
    %606 = vmatpush.xpose.msra.mxu0 0.0
    %607 = vmatpush.xpose.msra.mxu0 0.0
    %608 = vmatpush.xpose.msra.mxu0 0.0
    %609 = vmatpush.xpose.msra.mxu0 0.0
    %610 = vmatpush.xpose.msra.mxu0 0.0
    %611 = vmatpush.xpose.msra.mxu0 0.0
    %612 = vmatpush.xpose.msra.mxu0 0.0
    %613 = vmatpush.xpose.msra.mxu0 %v597
    %614 = vmatpush.xpose.msra.mxu0 %v595
    %615 = vmatmul.f32.gmra.mxu0 %v593
    %v616 = vpop.f32.mrf.mxu0
    %v617 = vadd.f32 0.0, %v616
    %618 = vdwg.mxu0
    %v620 = vsel %vm483, %v324, 0
    %v622 = vsel %vm483, %v352, 0
    %v624 = vsel %vm483, %v354, 0
    %626 = vmatpush.xpose.msra.mxu0 0.0
    %627 = vmatpush.xpose.msra.mxu0 0.0
    %628 = vmatpush.xpose.msra.mxu0 0.0
    %629 = vmatpush.xpose.msra.mxu0 0.0
    %630 = vmatpush.xpose.msra.mxu0 0.0
    %631 = vmatpush.xpose.msra.mxu0 0.0
    %632 = vmatpush.xpose.msra.mxu0 0.0
    %633 = vmatpush.xpose.msra.mxu0 0.0
    %634 = vmatpush.xpose.msra.mxu0 0.0
    %635 = vmatpush.xpose.msra.mxu0 0.0
    %636 = vmatpush.xpose.msra.mxu0 0.0
    %637 = vmatpush.xpose.msra.mxu0 0.0
    %638 = vmatpush.xpose.msra.mxu0 0.0
    %639 = vmatpush.xpose.msra.mxu0 0.0
    %640 = vmatpush.xpose.msra.mxu0 %v624
    %641 = vmatpush.xpose.msra.mxu0 %v622
    %642 = vmatmul.f32.gmra.mxu0 %v620
    %v643 = vpop.f32.mrf.mxu0
    %v644 = vadd.f32 0.0, %v643
    %645 = vdwg.mxu0
    %v647 = vsel %vm483, %v325, 0
    %v649 = vsel %vm483, %v356, 0
    %v651 = vsel %vm483, %v358, 0
    %653 = vmatpush.xpose.msra.mxu0 0.0
    %654 = vmatpush.xpose.msra.mxu0 0.0
    %655 = vmatpush.xpose.msra.mxu0 0.0
    %656 = vmatpush.xpose.msra.mxu0 0.0
    %657 = vmatpush.xpose.msra.mxu0 0.0
    %658 = vmatpush.xpose.msra.mxu0 0.0
    %659 = vmatpush.xpose.msra.mxu0 0.0
    %660 = vmatpush.xpose.msra.mxu0 0.0
    %661 = vmatpush.xpose.msra.mxu0 0.0
    %662 = vmatpush.xpose.msra.mxu0 0.0
    %663 = vmatpush.xpose.msra.mxu0 0.0
    %664 = vmatpush.xpose.msra.mxu0 0.0
    %665 = vmatpush.xpose.msra.mxu0 0.0
    %666 = vmatpush.xpose.msra.mxu0 0.0
    %667 = vmatpush.xpose.msra.mxu0 %v651
    %668 = vmatpush.xpose.msra.mxu0 %v649
    %669 = vmatmul.f32.gmra.mxu0 %v647
    %v670 = vpop.f32.mrf.mxu0
    %v671 = vadd.f32 0.0, %v670
    %672 = vdwg.mxu0
    %v674 = vsel %vm483, %v326, 0
    %v676 = vsel %vm483, %v360, 0
    %v678 = vsel %vm483, %v362, 0
    %680 = vmatpush.xpose.msra.mxu0 0.0
    %681 = vmatpush.xpose.msra.mxu0 0.0
    %682 = vmatpush.xpose.msra.mxu0 0.0
    %683 = vmatpush.xpose.msra.mxu0 0.0
    %684 = vmatpush.xpose.msra.mxu0 0.0
    %685 = vmatpush.xpose.msra.mxu0 0.0
    %686 = vmatpush.xpose.msra.mxu0 0.0
    %687 = vmatpush.xpose.msra.mxu0 0.0
    %688 = vmatpush.xpose.msra.mxu0 0.0
    %689 = vmatpush.xpose.msra.mxu0 0.0
    %690 = vmatpush.xpose.msra.mxu0 0.0
    %691 = vmatpush.xpose.msra.mxu0 0.0
    %692 = vmatpush.xpose.msra.mxu0 0.0
    %693 = vmatpush.xpose.msra.mxu0 0.0
    %694 = vmatpush.xpose.msra.mxu0 %v678
    %695 = vmatpush.xpose.msra.mxu0 %v676
    %696 = vmatmul.f32.gmra.mxu0 %v674
    %v697 = vpop.f32.mrf.mxu0
    %v698 = vadd.f32 0.0, %v697
    %699 = vdwg.mxu0
    %v701 = vsel %vm483, %v327, 0
    %v703 = vsel %vm483, %v364, 0
    %v705 = vsel %vm483, %v366, 0
    %707 = vmatpush.xpose.msra.mxu0 0.0
    %708 = vmatpush.xpose.msra.mxu0 0.0
    %709 = vmatpush.xpose.msra.mxu0 0.0
    %710 = vmatpush.xpose.msra.mxu0 0.0
    %711 = vmatpush.xpose.msra.mxu0 0.0
    %712 = vmatpush.xpose.msra.mxu0 0.0
    %713 = vmatpush.xpose.msra.mxu0 0.0
    %714 = vmatpush.xpose.msra.mxu0 0.0
    %715 = vmatpush.xpose.msra.mxu0 0.0
    %716 = vmatpush.xpose.msra.mxu0 0.0
    %717 = vmatpush.xpose.msra.mxu0 0.0
    %718 = vmatpush.xpose.msra.mxu0 0.0
    %719 = vmatpush.xpose.msra.mxu0 0.0
    %720 = vmatpush.xpose.msra.mxu0 0.0
    %721 = vmatpush.xpose.msra.mxu0 %v705
    %722 = vmatpush.xpose.msra.mxu0 %v703
    %723 = vmatmul.f32.gmra.mxu0 %v701
    %v724 = vpop.f32.mrf.mxu0
    %v725 = vadd.f32 0.0, %v724
    %726 = vdwg.mxu0
    %v728 = vsel %vm483, %v328, 0
    %v730 = vsel %vm483, %v368, 0
    %v732 = vsel %vm483, %v370, 0
    %734 = vmatpush.xpose.msra.mxu0 0.0
    %735 = vmatpush.xpose.msra.mxu0 0.0
    %736 = vmatpush.xpose.msra.mxu0 0.0
    %737 = vmatpush.xpose.msra.mxu0 0.0
    %738 = vmatpush.xpose.msra.mxu0 0.0
    %739 = vmatpush.xpose.msra.mxu0 0.0
    %740 = vmatpush.xpose.msra.mxu0 0.0
    %741 = vmatpush.xpose.msra.mxu0 0.0
    %742 = vmatpush.xpose.msra.mxu0 0.0
    %743 = vmatpush.xpose.msra.mxu0 0.0
    %744 = vmatpush.xpose.msra.mxu0 0.0
    %745 = vmatpush.xpose.msra.mxu0 0.0
    %746 = vmatpush.xpose.msra.mxu0 0.0
    %747 = vmatpush.xpose.msra.mxu0 0.0
    %748 = vmatpush.xpose.msra.mxu0 %v732
    %749 = vmatpush.xpose.msra.mxu0 %v730
    %750 = vmatmul.f32.gmra.mxu0 %v728
    %v751 = vpop.f32.mrf.mxu0
    %v752 = vadd.f32 0.0, %v751
    %753 = vdwg.mxu0
    %v755 = vsel %vm483, %v329, 0
    %v757 = vsel %vm483, %v372, 0
    %v759 = vsel %vm483, %v374, 0
    %761 = vmatpush.xpose.msra.mxu0 0.0
    %762 = vmatpush.xpose.msra.mxu0 0.0
    %763 = vmatpush.xpose.msra.mxu0 0.0
    %764 = vmatpush.xpose.msra.mxu0 0.0
    %765 = vmatpush.xpose.msra.mxu0 0.0
    %766 = vmatpush.xpose.msra.mxu0 0.0
    %767 = vmatpush.xpose.msra.mxu0 0.0
    %768 = vmatpush.xpose.msra.mxu0 0.0
    %769 = vmatpush.xpose.msra.mxu0 0.0
    %770 = vmatpush.xpose.msra.mxu0 0.0
    %771 = vmatpush.xpose.msra.mxu0 0.0
    %772 = vmatpush.xpose.msra.mxu0 0.0
    %773 = vmatpush.xpose.msra.mxu0 0.0
    %774 = vmatpush.xpose.msra.mxu0 0.0
    %775 = vmatpush.xpose.msra.mxu0 %v759
    %776 = vmatpush.xpose.msra.mxu0 %v757
    %777 = vmatmul.f32.gmra.mxu0 %v755
    %v778 = vpop.f32.mrf.mxu0
    %v779 = vadd.f32 0.0, %v778
    %780 = vdwg.mxu0
    %v782 = vsel %vm483, %v330, 0
    %v784 = vsel %vm483, %v376, 0
    %v786 = vsel %vm483, %v378, 0
    %788 = vmatpush.xpose.msra.mxu0 0.0
    %789 = vmatpush.xpose.msra.mxu0 0.0
    %790 = vmatpush.xpose.msra.mxu0 0.0
    %791 = vmatpush.xpose.msra.mxu0 0.0
    %792 = vmatpush.xpose.msra.mxu0 0.0
    %793 = vmatpush.xpose.msra.mxu0 0.0
    %794 = vmatpush.xpose.msra.mxu0 0.0
    %795 = vmatpush.xpose.msra.mxu0 0.0
    %796 = vmatpush.xpose.msra.mxu0 0.0
    %797 = vmatpush.xpose.msra.mxu0 0.0
    %798 = vmatpush.xpose.msra.mxu0 0.0
    %799 = vmatpush.xpose.msra.mxu0 0.0
    %800 = vmatpush.xpose.msra.mxu0 0.0
    %801 = vmatpush.xpose.msra.mxu0 0.0
    %802 = vmatpush.xpose.msra.mxu0 %v786
    %803 = vmatpush.xpose.msra.mxu0 %v784
    %804 = vmatmul.f32.gmra.mxu0 %v782
    %v805 = vpop.f32.mrf.mxu0
    %v806 = vadd.f32 0.0, %v805
    %807 = vdwg.mxu0
    %v809 = vsel %vm483, %v331, 0
    %v811 = vsel %vm483, %v380, 0
    %v813 = vsel %vm483, %v382, 0
    %815 = vmatpush.xpose.msra.mxu0 0.0
    %816 = vmatpush.xpose.msra.mxu0 0.0
    %817 = vmatpush.xpose.msra.mxu0 0.0
    %818 = vmatpush.xpose.msra.mxu0 0.0
    %819 = vmatpush.xpose.msra.mxu0 0.0
    %820 = vmatpush.xpose.msra.mxu0 0.0
    %821 = vmatpush.xpose.msra.mxu0 0.0
    %822 = vmatpush.xpose.msra.mxu0 0.0
    %823 = vmatpush.xpose.msra.mxu0 0.0
    %824 = vmatpush.xpose.msra.mxu0 0.0
    %825 = vmatpush.xpose.msra.mxu0 0.0
    %826 = vmatpush.xpose.msra.mxu0 0.0
    %827 = vmatpush.xpose.msra.mxu0 0.0
    %828 = vmatpush.xpose.msra.mxu0 0.0
    %829 = vmatpush.xpose.msra.mxu0 %v813
    %830 = vmatpush.xpose.msra.mxu0 %v811
    %831 = vmatmul.f32.gmra.mxu0 %v809
    %v832 = vpop.f32.mrf.mxu0
    %v833 = vadd.f32 0.0, %v832
    %834 = vdwg.mxu0
    %v836 = vsel %vm483, %v332, 0
    %v838 = vsel %vm483, %v384, 0
    %v840 = vsel %vm483, %v386, 0
    %842 = vmatpush.xpose.msra.mxu0 0.0
    %843 = vmatpush.xpose.msra.mxu0 0.0
    %844 = vmatpush.xpose.msra.mxu0 0.0
    %845 = vmatpush.xpose.msra.mxu0 0.0
    %846 = vmatpush.xpose.msra.mxu0 0.0
    %847 = vmatpush.xpose.msra.mxu0 0.0
    %848 = vmatpush.xpose.msra.mxu0 0.0
    %849 = vmatpush.xpose.msra.mxu0 0.0
    %850 = vmatpush.xpose.msra.mxu0 0.0
    %851 = vmatpush.xpose.msra.mxu0 0.0
    %852 = vmatpush.xpose.msra.mxu0 0.0
    %853 = vmatpush.xpose.msra.mxu0 0.0
    %854 = vmatpush.xpose.msra.mxu0 0.0
    %855 = vmatpush.xpose.msra.mxu0 0.0
    %856 = vmatpush.xpose.msra.mxu0 %v840
    %857 = vmatpush.xpose.msra.mxu0 %v838
    %858 = vmatmul.f32.gmra.mxu0 %v836
    %v859 = vpop.f32.mrf.mxu0
    %v860 = vadd.f32 0.0, %v859
    %861 = vdwg.mxu0
    %v863 = vsel %vm483, %v333, 0
    %v865 = vsel %vm483, %v388, 0
    %v867 = vsel %vm483, %v390, 0
    %869 = vmatpush.xpose.msra.mxu0 0.0
    %870 = vmatpush.xpose.msra.mxu0 0.0
    %871 = vmatpush.xpose.msra.mxu0 0.0
    %872 = vmatpush.xpose.msra.mxu0 0.0
    %873 = vmatpush.xpose.msra.mxu0 0.0
    %874 = vmatpush.xpose.msra.mxu0 0.0
    %875 = vmatpush.xpose.msra.mxu0 0.0
    %876 = vmatpush.xpose.msra.mxu0 0.0
    %877 = vmatpush.xpose.msra.mxu0 0.0
    %878 = vmatpush.xpose.msra.mxu0 0.0
    %879 = vmatpush.xpose.msra.mxu0 0.0
    %880 = vmatpush.xpose.msra.mxu0 0.0
    %881 = vmatpush.xpose.msra.mxu0 0.0
    %882 = vmatpush.xpose.msra.mxu0 0.0
    %883 = vmatpush.xpose.msra.mxu0 %v867
    %884 = vmatpush.xpose.msra.mxu0 %v865
    %885 = vmatmul.f32.gmra.mxu0 %v863
    %v886 = vpop.f32.mrf.mxu0
    %v887 = vadd.f32 0.0, %v886
    %888 = vdwg.mxu0
    %v890 = vsel %vm483, %v334, 0
    %v892 = vsel %vm483, %v392, 0
    %v894 = vsel %vm483, %v394, 0
    %896 = vmatpush.xpose.msra.mxu0 0.0
    %897 = vmatpush.xpose.msra.mxu0 0.0
    %898 = vmatpush.xpose.msra.mxu0 0.0
    %899 = vmatpush.xpose.msra.mxu0 0.0
    %900 = vmatpush.xpose.msra.mxu0 0.0
    %901 = vmatpush.xpose.msra.mxu0 0.0
    %902 = vmatpush.xpose.msra.mxu0 0.0
    %903 = vmatpush.xpose.msra.mxu0 0.0
    %904 = vmatpush.xpose.msra.mxu0 0.0
    %905 = vmatpush.xpose.msra.mxu0 0.0
    %906 = vmatpush.xpose.msra.mxu0 0.0
    %907 = vmatpush.xpose.msra.mxu0 0.0
    %908 = vmatpush.xpose.msra.mxu0 0.0
    %909 = vmatpush.xpose.msra.mxu0 0.0
    %910 = vmatpush.xpose.msra.mxu0 %v894
    %911 = vmatpush.xpose.msra.mxu0 %v892
    %912 = vmatmul.f32.gmra.mxu0 %v890
    %v913 = vpop.f32.mrf.mxu0
    %v914 = vadd.f32 0.0, %v913
    %915 = vdwg.mxu0
    %v916 = vsel %vm151, %v509, -inf
    %917 = vmax.xlane.f32.xlu0 %v916
    %v918 = vpop.xlane.xlu0 %917
    %v919 = vsel %vm151, %v536, -inf
    %920 = vmax.xlane.f32.xlu0 %v919
    %v921 = vpop.xlane.xlu0 %920
    %v922 = vsel %vm151, %v563, -inf
    %923 = vmax.xlane.f32.xlu0 %v922
    %v924 = vpop.xlane.xlu0 %923
    %v925 = vsel %vm151, %v590, -inf
    %926 = vmax.xlane.f32.xlu0 %v925
    %v927 = vpop.xlane.xlu0 %926
    %v928 = vsel %vm151, %v617, -inf
    %929 = vmax.xlane.f32.xlu0 %v928
    %v930 = vpop.xlane.xlu0 %929
    %v931 = vsel %vm151, %v644, -inf
    %932 = vmax.xlane.f32.xlu0 %v931
    %v933 = vpop.xlane.xlu0 %932
    %v934 = vsel %vm151, %v671, -inf
    %935 = vmax.xlane.f32.xlu0 %v934
    %v936 = vpop.xlane.xlu0 %935
    %v937 = vsel %vm151, %v698, -inf
    %938 = vmax.xlane.f32.xlu0 %v937
    %v939 = vpop.xlane.xlu0 %938
    %v940 = vsel %vm151, %v725, -inf
    %941 = vmax.xlane.f32.xlu0 %v940
    %v942 = vpop.xlane.xlu0 %941
    %v943 = vsel %vm151, %v752, -inf
    %944 = vmax.xlane.f32.xlu0 %v943
    %v945 = vpop.xlane.xlu0 %944
    %v946 = vsel %vm151, %v779, -inf
    %947 = vmax.xlane.f32.xlu0 %v946
    %v948 = vpop.xlane.xlu0 %947
    %v949 = vsel %vm151, %v806, -inf
    %950 = vmax.xlane.f32.xlu0 %v949
    %v951 = vpop.xlane.xlu0 %950
    %v952 = vsel %vm151, %v833, -inf
    %953 = vmax.xlane.f32.xlu0 %v952
    %v954 = vpop.xlane.xlu0 %953
    %v955 = vsel %vm151, %v860, -inf
    %956 = vmax.xlane.f32.xlu0 %v955
    %v957 = vpop.xlane.xlu0 %956
    %v958 = vsel %vm151, %v887, -inf
    %959 = vmax.xlane.f32.xlu0 %v958
    %v960 = vpop.xlane.xlu0 %959
    %v961 = vsel %vm151, %v914, -inf
    %962 = vmax.xlane.f32.xlu0 %v961
    %v963 = vpop.xlane.xlu0 %962
    %v964 = vsub.f32 %v509, %v918
    %v965 = vsub.f32 %v536, %v921
    %v966 = vsub.f32 %v563, %v924
    %v967 = vsub.f32 %v590, %v927
    %v968 = vsub.f32 %v617, %v930
    %v969 = vsub.f32 %v644, %v933
    %v970 = vsub.f32 %v671, %v936
    %v971 = vsub.f32 %v698, %v939
    %v972 = vsub.f32 %v725, %v942
    %v973 = vsub.f32 %v752, %v945
    %v974 = vsub.f32 %v779, %v948
    %v975 = vsub.f32 %v806, %v951
    %v976 = vsub.f32 %v833, %v954
    %v977 = vsub.f32 %v860, %v957
    %v978 = vsub.f32 %v887, %v960
    %v979 = vsub.f32 %v914, %v963
    %v980 = vmul.f32 %v964, 1.442695
    %v981 = vpow.pop %v980
    %v982 = vmul.f32 %v965, 1.442695
    %v983 = vpow.pop %v982
    %v984 = vmul.f32 %v966, 1.442695
    %v985 = vpow.pop %v984
    %v986 = vmul.f32 %v967, 1.442695
    %v987 = vpow.pop %v986
    %v988 = vmul.f32 %v968, 1.442695
    %v989 = vpow.pop %v988
    %v990 = vmul.f32 %v969, 1.442695
    %v991 = vpow.pop %v990
    %v992 = vmul.f32 %v970, 1.442695
    %v993 = vpow.pop %v992
    %v994 = vmul.f32 %v971, 1.442695
    %v995 = vpow.pop %v994
    %v996 = vmul.f32 %v972, 1.442695
    %v997 = vpow.pop %v996
    %v998 = vmul.f32 %v973, 1.442695
    %v999 = vpow.pop %v998
    %v1000 = vmul.f32 %v974, 1.442695
    %v1001 = vpow.pop %v1000
    %v1002 = vmul.f32 %v975, 1.442695
    %v1003 = vpow.pop %v1002
    %v1004 = vmul.f32 %v976, 1.442695
    %v1005 = vpow.pop %v1004
    %v1006 = vmul.f32 %v977, 1.442695
    %v1007 = vpow.pop %v1006
    %v1008 = vmul.f32 %v978, 1.442695
    %v1009 = vpow.pop %v1008
    %v1010 = vmul.f32 %v979, 1.442695
    %v1011 = vpow.pop %v1010
    %v1012 = vsel %vm151, %v981, 0.0
    %1013 = vadd.xlane.f32.xlu0 %v1012
    %v1014 = vpop.xlane.xlu0 %1013
    %v1015 = vsel %vm151, %v983, 0.0
    %1016 = vadd.xlane.f32.xlu0 %v1015
    %v1017 = vpop.xlane.xlu0 %1016
    %v1018 = vsel %vm151, %v985, 0.0
    %1019 = vadd.xlane.f32.xlu0 %v1018
    %v1020 = vpop.xlane.xlu0 %1019
    %v1021 = vsel %vm151, %v987, 0.0
    %1022 = vadd.xlane.f32.xlu0 %v1021
    %v1023 = vpop.xlane.xlu0 %1022
    %v1024 = vsel %vm151, %v989, 0.0
    %1025 = vadd.xlane.f32.xlu0 %v1024
    %v1026 = vpop.xlane.xlu0 %1025
    %v1027 = vsel %vm151, %v991, 0.0
    %1028 = vadd.xlane.f32.xlu0 %v1027
    %v1029 = vpop.xlane.xlu0 %1028
    %v1030 = vsel %vm151, %v993, 0.0
    %1031 = vadd.xlane.f32.xlu0 %v1030
    %v1032 = vpop.xlane.xlu0 %1031
    %v1033 = vsel %vm151, %v995, 0.0
    %1034 = vadd.xlane.f32.xlu0 %v1033
    %v1035 = vpop.xlane.xlu0 %1034
    %v1036 = vsel %vm151, %v997, 0.0
    %1037 = vadd.xlane.f32.xlu0 %v1036
    %v1038 = vpop.xlane.xlu0 %1037
    %v1039 = vsel %vm151, %v999, 0.0
    %1040 = vadd.xlane.f32.xlu0 %v1039
    %v1041 = vpop.xlane.xlu0 %1040
    %v1042 = vsel %vm151, %v1001, 0.0
    %1043 = vadd.xlane.f32.xlu0 %v1042
    %v1044 = vpop.xlane.xlu0 %1043
    %v1045 = vsel %vm151, %v1003, 0.0
    %1046 = vadd.xlane.f32.xlu0 %v1045
    %v1047 = vpop.xlane.xlu0 %1046
    %v1048 = vsel %vm151, %v1005, 0.0
    %1049 = vadd.xlane.f32.xlu0 %v1048
    %v1050 = vpop.xlane.xlu0 %1049
    %v1051 = vsel %vm151, %v1007, 0.0
    %1052 = vadd.xlane.f32.xlu0 %v1051
    %v1053 = vpop.xlane.xlu0 %1052
    %v1054 = vsel %vm151, %v1009, 0.0
    %1055 = vadd.xlane.f32.xlu0 %v1054
    %v1056 = vpop.xlane.xlu0 %1055
    %v1057 = vsel %vm151, %v1011, 0.0
    %1058 = vadd.xlane.f32.xlu0 %v1057
    %v1059 = vpop.xlane.xlu0 %1058
    %v1060 = vrcp.pop %v1014
    %v1061 = vrcp.pop %v1017
    %v1062 = vrcp.pop %v1020
    %v1063 = vrcp.pop %v1023
    %v1064 = vrcp.pop %v1026
    %v1065 = vrcp.pop %v1029
    %v1066 = vrcp.pop %v1032
    %v1067 = vrcp.pop %v1035
    %v1068 = vrcp.pop %v1038
    %v1069 = vrcp.pop %v1041
    %v1070 = vrcp.pop %v1044
    %v1071 = vrcp.pop %v1047
    %v1072 = vrcp.pop %v1050
    %v1073 = vrcp.pop %v1053
    %v1074 = vrcp.pop %v1056
    %v1075 = vrcp.pop %v1059
    %v1076 = vmul.f32 %v981, %v1060
    %v1077 = vmul.f32 %v983, %v1061
    %v1078 = vmul.f32 %v985, %v1062
    %v1079 = vmul.f32 %v987, %v1063
    %v1080 = vmul.f32 %v989, %v1064
    %v1081 = vmul.f32 %v991, %v1065
    %v1082 = vmul.f32 %v993, %v1066
    %v1083 = vmul.f32 %v995, %v1067
    %v1084 = vmul.f32 %v997, %v1068
    %v1085 = vmul.f32 %v999, %v1069
    %v1086 = vmul.f32 %v1001, %v1070
    %v1087 = vmul.f32 %v1003, %v1071
    %v1088 = vmul.f32 %v1005, %v1072
    %v1089 = vmul.f32 %v1007, %v1073
    %v1090 = vmul.f32 %v1009, %v1074
    %v1091 = vmul.f32 %v1011, %v1075
    %v1093 = vsel %vm151, %v1076, 0
    %1095 = vmatpush.msra.mxu0 0.0
    %1096 = vmatpush.msra.mxu0 0.0
    %1097 = vmatpush.msra.mxu0 0.0
    %1098 = vmatpush.msra.mxu0 0.0
    %1099 = vmatpush.msra.mxu0 0.0
    %1100 = vmatpush.msra.mxu0 0.0
    %1101 = vmatpush.msra.mxu0 0.0
    %1102 = vmatpush.msra.mxu0 0.0
    %1103 = vmatpush.msra.mxu0 0.0
    %1104 = vmatpush.msra.mxu0 0.0
    %1105 = vmatpush.msra.mxu0 0.0
    %1106 = vmatpush.msra.mxu0 0.0
    %1107 = vmatpush.msra.mxu0 0.0
    %1108 = vmatpush.msra.mxu0 0.0
    %1109 = vmatpush.msra.mxu0 %v267
    %1110 = vmatpush.msra.mxu0 %v264
    %1111 = vmatmul.f32.gmra.mxu0 %v1093
    %v1112 = vpop.f32.mrf.mxu0
    %v1113 = vadd.f32 0.0, %v1112
    %1114 = vdwg.mxu0
    %v1116 = vsel %vm151, %v1077, 0
    %1118 = vmatpush.msra.mxu0 0.0
    %1119 = vmatpush.msra.mxu0 0.0
    %1120 = vmatpush.msra.mxu0 0.0
    %1121 = vmatpush.msra.mxu0 0.0
    %1122 = vmatpush.msra.mxu0 0.0
    %1123 = vmatpush.msra.mxu0 0.0
    %1124 = vmatpush.msra.mxu0 0.0
    %1125 = vmatpush.msra.mxu0 0.0
    %1126 = vmatpush.msra.mxu0 0.0
    %1127 = vmatpush.msra.mxu0 0.0
    %1128 = vmatpush.msra.mxu0 0.0
    %1129 = vmatpush.msra.mxu0 0.0
    %1130 = vmatpush.msra.mxu0 0.0
    %1131 = vmatpush.msra.mxu0 0.0
    %1132 = vmatpush.msra.mxu0 %v273
    %1133 = vmatpush.msra.mxu0 %v270
    %1134 = vmatmul.f32.gmra.mxu0 %v1116
    %v1135 = vpop.f32.mrf.mxu0
    %v1136 = vadd.f32 0.0, %v1135
    %1137 = vdwg.mxu0
    %v1139 = vsel %vm151, %v1078, 0
    %1141 = vmatpush.msra.mxu0 0.0
    %1142 = vmatpush.msra.mxu0 0.0
    %1143 = vmatpush.msra.mxu0 0.0
    %1144 = vmatpush.msra.mxu0 0.0
    %1145 = vmatpush.msra.mxu0 0.0
    %1146 = vmatpush.msra.mxu0 0.0
    %1147 = vmatpush.msra.mxu0 0.0
    %1148 = vmatpush.msra.mxu0 0.0
    %1149 = vmatpush.msra.mxu0 0.0
    %1150 = vmatpush.msra.mxu0 0.0
    %1151 = vmatpush.msra.mxu0 0.0
    %1152 = vmatpush.msra.mxu0 0.0
    %1153 = vmatpush.msra.mxu0 0.0
    %1154 = vmatpush.msra.mxu0 0.0
    %1155 = vmatpush.msra.mxu0 %v402
    %1156 = vmatpush.msra.mxu0 %v400
    %1157 = vmatmul.f32.gmra.mxu0 %v1139
    %v1158 = vpop.f32.mrf.mxu0
    %v1159 = vadd.f32 0.0, %v1158
    %1160 = vdwg.mxu0
    %v1162 = vsel %vm151, %v1079, 0
    %1164 = vmatpush.msra.mxu0 0.0
    %1165 = vmatpush.msra.mxu0 0.0
    %1166 = vmatpush.msra.mxu0 0.0
    %1167 = vmatpush.msra.mxu0 0.0
    %1168 = vmatpush.msra.mxu0 0.0
    %1169 = vmatpush.msra.mxu0 0.0
    %1170 = vmatpush.msra.mxu0 0.0
    %1171 = vmatpush.msra.mxu0 0.0
    %1172 = vmatpush.msra.mxu0 0.0
    %1173 = vmatpush.msra.mxu0 0.0
    %1174 = vmatpush.msra.mxu0 0.0
    %1175 = vmatpush.msra.mxu0 0.0
    %1176 = vmatpush.msra.mxu0 0.0
    %1177 = vmatpush.msra.mxu0 0.0
    %1178 = vmatpush.msra.mxu0 %v406
    %1179 = vmatpush.msra.mxu0 %v404
    %1180 = vmatmul.f32.gmra.mxu0 %v1162
    %v1181 = vpop.f32.mrf.mxu0
    %v1182 = vadd.f32 0.0, %v1181
    %1183 = vdwg.mxu0
    %v1185 = vsel %vm151, %v1080, 0
    %1187 = vmatpush.msra.mxu0 0.0
    %1188 = vmatpush.msra.mxu0 0.0
    %1189 = vmatpush.msra.mxu0 0.0
    %1190 = vmatpush.msra.mxu0 0.0
    %1191 = vmatpush.msra.mxu0 0.0
    %1192 = vmatpush.msra.mxu0 0.0
    %1193 = vmatpush.msra.mxu0 0.0
    %1194 = vmatpush.msra.mxu0 0.0
    %1195 = vmatpush.msra.mxu0 0.0
    %1196 = vmatpush.msra.mxu0 0.0
    %1197 = vmatpush.msra.mxu0 0.0
    %1198 = vmatpush.msra.mxu0 0.0
    %1199 = vmatpush.msra.mxu0 0.0
    %1200 = vmatpush.msra.mxu0 0.0
    %1201 = vmatpush.msra.mxu0 %v414
    %1202 = vmatpush.msra.mxu0 %v412
    %1203 = vmatmul.f32.gmra.mxu0 %v1185
    %v1204 = vpop.f32.mrf.mxu0
    %v1205 = vadd.f32 0.0, %v1204
    %1206 = vdwg.mxu0
    %v1208 = vsel %vm151, %v1081, 0
    %1210 = vmatpush.msra.mxu0 0.0
    %1211 = vmatpush.msra.mxu0 0.0
    %1212 = vmatpush.msra.mxu0 0.0
    %1213 = vmatpush.msra.mxu0 0.0
    %1214 = vmatpush.msra.mxu0 0.0
    %1215 = vmatpush.msra.mxu0 0.0
    %1216 = vmatpush.msra.mxu0 0.0
    %1217 = vmatpush.msra.mxu0 0.0
    %1218 = vmatpush.msra.mxu0 0.0
    %1219 = vmatpush.msra.mxu0 0.0
    %1220 = vmatpush.msra.mxu0 0.0
    %1221 = vmatpush.msra.mxu0 0.0
    %1222 = vmatpush.msra.mxu0 0.0
    %1223 = vmatpush.msra.mxu0 0.0
    %1224 = vmatpush.msra.mxu0 %v418
    %1225 = vmatpush.msra.mxu0 %v416
    %1226 = vmatmul.f32.gmra.mxu0 %v1208
    %v1227 = vpop.f32.mrf.mxu0
    %v1228 = vadd.f32 0.0, %v1227
    %1229 = vdwg.mxu0
    %v1231 = vsel %vm151, %v1082, 0
    %1233 = vmatpush.msra.mxu0 0.0
    %1234 = vmatpush.msra.mxu0 0.0
    %1235 = vmatpush.msra.mxu0 0.0
    %1236 = vmatpush.msra.mxu0 0.0
    %1237 = vmatpush.msra.mxu0 0.0
    %1238 = vmatpush.msra.mxu0 0.0
    %1239 = vmatpush.msra.mxu0 0.0
    %1240 = vmatpush.msra.mxu0 0.0
    %1241 = vmatpush.msra.mxu0 0.0
    %1242 = vmatpush.msra.mxu0 0.0
    %1243 = vmatpush.msra.mxu0 0.0
    %1244 = vmatpush.msra.mxu0 0.0
    %1245 = vmatpush.msra.mxu0 0.0
    %1246 = vmatpush.msra.mxu0 0.0
    %1247 = vmatpush.msra.mxu0 %v426
    %1248 = vmatpush.msra.mxu0 %v424
    %1249 = vmatmul.f32.gmra.mxu0 %v1231
    %v1250 = vpop.f32.mrf.mxu0
    %v1251 = vadd.f32 0.0, %v1250
    %1252 = vdwg.mxu0
    %v1254 = vsel %vm151, %v1083, 0
    %1256 = vmatpush.msra.mxu0 0.0
    %1257 = vmatpush.msra.mxu0 0.0
    %1258 = vmatpush.msra.mxu0 0.0
    %1259 = vmatpush.msra.mxu0 0.0
    %1260 = vmatpush.msra.mxu0 0.0
    %1261 = vmatpush.msra.mxu0 0.0
    %1262 = vmatpush.msra.mxu0 0.0
    %1263 = vmatpush.msra.mxu0 0.0
    %1264 = vmatpush.msra.mxu0 0.0
    %1265 = vmatpush.msra.mxu0 0.0
    %1266 = vmatpush.msra.mxu0 0.0
    %1267 = vmatpush.msra.mxu0 0.0
    %1268 = vmatpush.msra.mxu0 0.0
    %1269 = vmatpush.msra.mxu0 0.0
    %1270 = vmatpush.msra.mxu0 %v430
    %1271 = vmatpush.msra.mxu0 %v428
    %1272 = vmatmul.f32.gmra.mxu0 %v1254
    %v1273 = vpop.f32.mrf.mxu0
    %v1274 = vadd.f32 0.0, %v1273
    %1275 = vdwg.mxu0
    %v1277 = vsel %vm151, %v1084, 0
    %1279 = vmatpush.msra.mxu0 0.0
    %1280 = vmatpush.msra.mxu0 0.0
    %1281 = vmatpush.msra.mxu0 0.0
    %1282 = vmatpush.msra.mxu0 0.0
    %1283 = vmatpush.msra.mxu0 0.0
    %1284 = vmatpush.msra.mxu0 0.0
    %1285 = vmatpush.msra.mxu0 0.0
    %1286 = vmatpush.msra.mxu0 0.0
    %1287 = vmatpush.msra.mxu0 0.0
    %1288 = vmatpush.msra.mxu0 0.0
    %1289 = vmatpush.msra.mxu0 0.0
    %1290 = vmatpush.msra.mxu0 0.0
    %1291 = vmatpush.msra.mxu0 0.0
    %1292 = vmatpush.msra.mxu0 0.0
    %1293 = vmatpush.msra.mxu0 %v438
    %1294 = vmatpush.msra.mxu0 %v436
    %1295 = vmatmul.f32.gmra.mxu0 %v1277
    %v1296 = vpop.f32.mrf.mxu0
    %v1297 = vadd.f32 0.0, %v1296
    %1298 = vdwg.mxu0
    %v1300 = vsel %vm151, %v1085, 0
    %1302 = vmatpush.msra.mxu0 0.0
    %1303 = vmatpush.msra.mxu0 0.0
    %1304 = vmatpush.msra.mxu0 0.0
    %1305 = vmatpush.msra.mxu0 0.0
    %1306 = vmatpush.msra.mxu0 0.0
    %1307 = vmatpush.msra.mxu0 0.0
    %1308 = vmatpush.msra.mxu0 0.0
    %1309 = vmatpush.msra.mxu0 0.0
    %1310 = vmatpush.msra.mxu0 0.0
    %1311 = vmatpush.msra.mxu0 0.0
    %1312 = vmatpush.msra.mxu0 0.0
    %1313 = vmatpush.msra.mxu0 0.0
    %1314 = vmatpush.msra.mxu0 0.0
    %1315 = vmatpush.msra.mxu0 0.0
    %1316 = vmatpush.msra.mxu0 %v442
    %1317 = vmatpush.msra.mxu0 %v440
    %1318 = vmatmul.f32.gmra.mxu0 %v1300
    %v1319 = vpop.f32.mrf.mxu0
    %v1320 = vadd.f32 0.0, %v1319
    %1321 = vdwg.mxu0
    %v1323 = vsel %vm151, %v1086, 0
    %1325 = vmatpush.msra.mxu0 0.0
    %1326 = vmatpush.msra.mxu0 0.0
    %1327 = vmatpush.msra.mxu0 0.0
    %1328 = vmatpush.msra.mxu0 0.0
    %1329 = vmatpush.msra.mxu0 0.0
    %1330 = vmatpush.msra.mxu0 0.0
    %1331 = vmatpush.msra.mxu0 0.0
    %1332 = vmatpush.msra.mxu0 0.0
    %1333 = vmatpush.msra.mxu0 0.0
    %1334 = vmatpush.msra.mxu0 0.0
    %1335 = vmatpush.msra.mxu0 0.0
    %1336 = vmatpush.msra.mxu0 0.0
    %1337 = vmatpush.msra.mxu0 0.0
    %1338 = vmatpush.msra.mxu0 0.0
    %1339 = vmatpush.msra.mxu0 %v450
    %1340 = vmatpush.msra.mxu0 %v448
    %1341 = vmatmul.f32.gmra.mxu0 %v1323
    %v1342 = vpop.f32.mrf.mxu0
    %v1343 = vadd.f32 0.0, %v1342
    %1344 = vdwg.mxu0
    %v1346 = vsel %vm151, %v1087, 0
    %1348 = vmatpush.msra.mxu0 0.0
    %1349 = vmatpush.msra.mxu0 0.0
    %1350 = vmatpush.msra.mxu0 0.0
    %1351 = vmatpush.msra.mxu0 0.0
    %1352 = vmatpush.msra.mxu0 0.0
    %1353 = vmatpush.msra.mxu0 0.0
    %1354 = vmatpush.msra.mxu0 0.0
    %1355 = vmatpush.msra.mxu0 0.0
    %1356 = vmatpush.msra.mxu0 0.0
    %1357 = vmatpush.msra.mxu0 0.0
    %1358 = vmatpush.msra.mxu0 0.0
    %1359 = vmatpush.msra.mxu0 0.0
    %1360 = vmatpush.msra.mxu0 0.0
    %1361 = vmatpush.msra.mxu0 0.0
    %1362 = vmatpush.msra.mxu0 %v454
    %1363 = vmatpush.msra.mxu0 %v452
    %1364 = vmatmul.f32.gmra.mxu0 %v1346
    %v1365 = vpop.f32.mrf.mxu0
    %v1366 = vadd.f32 0.0, %v1365
    %1367 = vdwg.mxu0
    %v1369 = vsel %vm151, %v1088, 0
    %1371 = vmatpush.msra.mxu0 0.0
    %1372 = vmatpush.msra.mxu0 0.0
    %1373 = vmatpush.msra.mxu0 0.0
    %1374 = vmatpush.msra.mxu0 0.0
    %1375 = vmatpush.msra.mxu0 0.0
    %1376 = vmatpush.msra.mxu0 0.0
    %1377 = vmatpush.msra.mxu0 0.0
    %1378 = vmatpush.msra.mxu0 0.0
    %1379 = vmatpush.msra.mxu0 0.0
    %1380 = vmatpush.msra.mxu0 0.0
    %1381 = vmatpush.msra.mxu0 0.0
    %1382 = vmatpush.msra.mxu0 0.0
    %1383 = vmatpush.msra.mxu0 0.0
    %1384 = vmatpush.msra.mxu0 0.0
    %1385 = vmatpush.msra.mxu0 %v462
    %1386 = vmatpush.msra.mxu0 %v460
    %1387 = vmatmul.f32.gmra.mxu0 %v1369
    %v1388 = vpop.f32.mrf.mxu0
    %v1389 = vadd.f32 0.0, %v1388
    %1390 = vdwg.mxu0
    %v1392 = vsel %vm151, %v1089, 0
    %1394 = vmatpush.msra.mxu0 0.0
    %1395 = vmatpush.msra.mxu0 0.0
    %1396 = vmatpush.msra.mxu0 0.0
    %1397 = vmatpush.msra.mxu0 0.0
    %1398 = vmatpush.msra.mxu0 0.0
    %1399 = vmatpush.msra.mxu0 0.0
    %1400 = vmatpush.msra.mxu0 0.0
    %1401 = vmatpush.msra.mxu0 0.0
    %1402 = vmatpush.msra.mxu0 0.0
    %1403 = vmatpush.msra.mxu0 0.0
    %1404 = vmatpush.msra.mxu0 0.0
    %1405 = vmatpush.msra.mxu0 0.0
    %1406 = vmatpush.msra.mxu0 0.0
    %1407 = vmatpush.msra.mxu0 0.0
    %1408 = vmatpush.msra.mxu0 %v466
    %1409 = vmatpush.msra.mxu0 %v464
    %1410 = vmatmul.f32.gmra.mxu0 %v1392
    %v1411 = vpop.f32.mrf.mxu0
    %v1412 = vadd.f32 0.0, %v1411
    %1413 = vdwg.mxu0
    %v1415 = vsel %vm151, %v1090, 0
    %1417 = vmatpush.msra.mxu0 0.0
    %1418 = vmatpush.msra.mxu0 0.0
    %1419 = vmatpush.msra.mxu0 0.0
    %1420 = vmatpush.msra.mxu0 0.0
    %1421 = vmatpush.msra.mxu0 0.0
    %1422 = vmatpush.msra.mxu0 0.0
    %1423 = vmatpush.msra.mxu0 0.0
    %1424 = vmatpush.msra.mxu0 0.0
    %1425 = vmatpush.msra.mxu0 0.0
    %1426 = vmatpush.msra.mxu0 0.0
    %1427 = vmatpush.msra.mxu0 0.0
    %1428 = vmatpush.msra.mxu0 0.0
    %1429 = vmatpush.msra.mxu0 0.0
    %1430 = vmatpush.msra.mxu0 0.0
    %1431 = vmatpush.msra.mxu0 %v474
    %1432 = vmatpush.msra.mxu0 %v472
    %1433 = vmatmul.f32.gmra.mxu0 %v1415
    %v1434 = vpop.f32.mrf.mxu0
    %v1435 = vadd.f32 0.0, %v1434
    %1436 = vdwg.mxu0
    %v1438 = vsel %vm151, %v1091, 0
    %1440 = vmatpush.msra.mxu0 0.0
    %1441 = vmatpush.msra.mxu0 0.0
    %1442 = vmatpush.msra.mxu0 0.0
    %1443 = vmatpush.msra.mxu0 0.0
    %1444 = vmatpush.msra.mxu0 0.0
    %1445 = vmatpush.msra.mxu0 0.0
    %1446 = vmatpush.msra.mxu0 0.0
    %1447 = vmatpush.msra.mxu0 0.0
    %1448 = vmatpush.msra.mxu0 0.0
    %1449 = vmatpush.msra.mxu0 0.0
    %1450 = vmatpush.msra.mxu0 0.0
    %1451 = vmatpush.msra.mxu0 0.0
    %1452 = vmatpush.msra.mxu0 0.0
    %1453 = vmatpush.msra.mxu0 0.0
    %1454 = vmatpush.msra.mxu0 %v478
    %1455 = vmatpush.msra.mxu0 %v476
    %1456 = vmatmul.f32.gmra.mxu0 %v1438
    %v1457 = vpop.f32.mrf.mxu0
    %v1458 = vadd.f32 0.0, %v1457
    %1459 = vdwg.mxu0
    %1462 = vrot.lane.b32.xlu0 %v1159, 4
    %v1463 = vpop.permute.xlu0 %1462
    %1464 = vrot.lane.b32.xlu0 %v1182, 4
    %v1465 = vpop.permute.xlu0 %1464
    %1470 = vrot.lane.b32.xlu0 %v1205, 8
    %v1471 = vpop.permute.xlu0 %1470
    %1472 = vrot.lane.b32.xlu0 %v1228, 8
    %v1473 = vpop.permute.xlu0 %1472
    %1478 = vrot.lane.b32.xlu0 %v1251, 12
    %v1479 = vpop.permute.xlu0 %1478
    %1480 = vrot.lane.b32.xlu0 %v1274, 12
    %v1481 = vpop.permute.xlu0 %1480
    %1486 = vrot.lane.b32.xlu0 %v1297, 16
    %v1487 = vpop.permute.xlu0 %1486
    %1488 = vrot.lane.b32.xlu0 %v1320, 16
    %v1489 = vpop.permute.xlu0 %1488
    %1494 = vrot.lane.b32.xlu0 %v1343, 20
    %v1495 = vpop.permute.xlu0 %1494
    %1496 = vrot.lane.b32.xlu0 %v1366, 20
    %v1497 = vpop.permute.xlu0 %1496
    %1502 = vrot.lane.b32.xlu0 %v1389, 24
    %v1503 = vpop.permute.xlu0 %1502
    %1504 = vrot.lane.b32.xlu0 %v1412, 24
    %v1505 = vpop.permute.xlu0 %1504
    %1510 = vrot.lane.b32.xlu0 %v1435, 28
    %v1511 = vpop.permute.xlu0 %1510
    %1512 = vrot.lane.b32.xlu0 %v1458, 28
    %v1513 = vpop.permute.xlu0 %1512
    %v1516 = vsel %vm483, %v1113, %v1463
    %v1517 = vsel %vm483, %v1136, %v1465
    %vm1518 = vcmask 64512
    %v1519 = vsel %vm1518, %v1516, %v1471
    %v1520 = vsel %vm1518, %v1517, %v1473
    %vm1521 = vcmask 97280
    %v1522 = vsel %vm1521, %v1519, %v1479
    %v1523 = vsel %vm1521, %v1520, %v1481
    %v1524 = vsel %vm151, %v1522, %v1487
    %v1525 = vsel %vm151, %v1523, %v1489
    %v1526 = vsel %vm229, %v1524, %v1495
    %v1527 = vsel %vm229, %v1525, %v1497
    %v1528 = vsel %vm184, %v1526, %v1503
    %v1529 = vsel %vm184, %v1527, %v1505
    %vm1530 = vcmask 228352
    %v1531 = vsel %vm1530, %v1528, %v1511
    %v1532 = vsel %vm1530, %v1529, %v1513
    %v1533 = vadd.f32 %v176, %v1531
    %v1534 = vadd.f32 %v179, %v1532
    %v1535 = vld [vmem:[#allocation13] sm:$0xff]
    %v1536 = vld [vmem:[#allocation13 + $0x8] sm:$0xff]
    %v1537 = vld [vmem:[#allocation13 + $0x10] sm:$0xff]
    %v1538 = vld [vmem:[#allocation13 + $0x18] sm:$0xff]
    %v1539 = vld [vmem:[%s7] sm:$0x1]
    %v1541 = vperm.slane %v1539, 0
    %vm1543 = vcmask 261120
    %v1545 = vsel %vm1543, %v1533, 0
    %v1548 = vsel %vm1543, %v1534, 0
    %1550 = vmatpush.msra.mxu0 0.0
    %1551 = vmatpush.msra.mxu0 0.0
    %1552 = vmatpush.msra.mxu0 0.0
    %1553 = vmatpush.msra.mxu0 0.0
    %1554 = vmatpush.msra.mxu0 0.0
    %1555 = vmatpush.msra.mxu0 0.0
    %1556 = vmatpush.msra.mxu0 0.0
    %1557 = vmatpush.msra.mxu0 0.0
    %1558 = vmatpush.msra.mxu0 0.0
    %1559 = vmatpush.msra.mxu0 0.0
    %1560 = vmatpush.msra.mxu0 0.0
    %1561 = vmatpush.msra.mxu0 0.0
    %1562 = vmatpush.msra.mxu0 %v1538
    %1563 = vmatpush.msra.mxu0 %v1537
    %1564 = vmatpush.msra.mxu0 %v1536
    %1565 = vmatpush.msra.mxu0 %v1535
    %1566 = vmatmul.f32.gmra.mxu0 %v1545
    %v1567 = vpop.f32.mrf.mxu0
    %v1568 = vadd.f32 %v1541, %v1567
    %1569 = vmatmul.f32.gmra.mxu0 %v1548
    %v1570 = vpop.f32.mrf.mxu0
    %v1571 = vadd.f32 %v1541, %v1570
    %1572 = vdwg.mxu0
    %v1573 = vmax.f32 %v1568, 0.0
    %v1574 = vmax.f32 %v1571, 0.0
    %v1575 = vadd.f32 %v1533, %v1573
    %v1576 = vadd.f32 %v1534, %v1574
    %1577 = vst.msk [vmem:[#allocation14] sm:$0xff] %vm1543, %v1575
    %1578 = vst.msk [vmem:[#allocation14 + $0x8] sm:$0xff] %vm1543, %v1576
    // Predicated region
    $region62: #{tpu_custom_call.1} parent=1 // pred_check
      _
    $region63: #{tpu_custom_call.1} parent=1 // pred_check_branch
      %1580 = sbr.rel (0) target = $region65
    $region64: #{tpu_custom_call.1} parent=1 // pred_region
      %1582 = vsyncadd [#allocation4], 0
      %s1583 = sshll.u32 [#allocation14], 4
      %s1584 = int_to_ptr.vmem [resolvable:$true] %s1583
      %s1585 = sshll.u32 %s8, 4
      %s1586 = int_to_ptr.hbm [resolvable:$true] %s1585
      %1591 = dma.vmem_to_hbm [thread:$0]  %s1584, 256, %s1586, [#allocation4], 128, 128, 8
    $region65: #{tpu_custom_call.1} parent=1 // pred_fallthru
      _
    // Predicated region
    $region66: #{tpu_custom_call.1} parent=1 // pred_check
      _
    $region67: #{tpu_custom_call.1} parent=1 // pred_check_branch
      %1593 = sbr.rel (0) target = $region69
    $region68: #{tpu_custom_call.1} parent=1 // pred_region
      %1595 = dma.done [#allocation4], 256
    $region69: #{tpu_custom_call.1} parent=1 // pred_fallthru
      _
    %1596 = vsyncpa [#allocation3], 1
    %1597 = vsyncpa [#allocation6], 1
    %1598 = vsyncpa [#allocation9], 1
    %1599 = vsyncpa [#allocation12], 1
    %1600 = vsyncpa [#allocation4], 1

</llo_original>
